<compile_context>
chip_gen: v6e
topology: v6e:2x2x1
jax: 0.10.0
libtpu: 0.0.40
codegen_flags: <defaults>
</compile_context>

<pallas_src>
import functools
import math

import jax
import jax.numpy as jnp
from jax.experimental import pallas as pl
from jax.experimental.pallas import tpu as pltpu


def _fused_loss(scores, *, B, K):
    """Fused pos/neg loss over a (B, K+1) score block (slot 0 = positive)."""
    scores = jnp.clip(scores, -10.0, 10.0)
    slot = jax.lax.broadcasted_iota(jnp.int32, scores.shape, 1)
    sign = jnp.where(slot == 0, 1.0, -1.0)
    weight = jnp.where(slot == 0, 1.0 / B, 1.0 / (B * K))
    z = sign * scores
    # stable log(sigmoid(z)) = min(z, 0) - log(1 + exp(-|z|)); |z| == |scores|
    log_sig = jnp.minimum(z, 0.0) - jnp.log(1.0 + jnp.exp(-jnp.abs(scores)))
    # pos_loss + neg_loss = -sum_j w_j * logsigmoid(sign_j * score_j)
    return -jnp.sum(log_sig * weight, axis=(0, 1), keepdims=True)      # (1, 1)


# --------------------------------------------------------------------------
# Path 1: small vocab -- tables VMEM-resident, gather + contraction on MXU.
# --------------------------------------------------------------------------
def _skipgram_mxu_kernel(tgt_ref, sel_ref, word_tab_ref, ctx_tab_ref, loss_ref,
                         *, B, K, V):
    word_tab = word_tab_ref[...]                                       # (V, D)
    ctx_tab = ctx_tab_ref[...]                                         # (V, D)
    iota_v = jax.lax.broadcasted_iota(jnp.int32, (B, V), 1)

    # Word-row gather as a one-hot matmul on the MXU (exact: mask is 0/1).
    word_onehot = (iota_v == tgt_ref[...]).astype(word_tab.dtype)      # (B, V)
    word_rows = jax.lax.dot_general(
        word_onehot, word_tab, (((1,), (0,)), ((), ())),
        preferred_element_type=jnp.float32,
        precision=jax.lax.Precision.HIGHEST)                           # (B, D)

    # Scores against every context-table row in one MXU contraction over D.
    scores_all = jax.lax.dot_general(
        word_rows.astype(ctx_tab.dtype), ctx_tab, (((1,), (1,)), ((), ())),
        preferred_element_type=jnp.float32,
        precision=jax.lax.Precision.HIGHEST)                           # (B, V)

    # Select slot 0 (positive context) + K negatives with one-hot masks.
    sel = sel_ref[...]                                                 # (B, K+1)
    cols = []
    for j in range(K + 1):                           # static, small unroll
        onehot_j = (iota_v == sel[:, j:j + 1]).astype(jnp.float32)     # (B, V)
        cols.append(jnp.sum(scores_all * onehot_j, axis=-1, keepdims=True))
    scores = jnp.concatenate(cols, axis=-1)                            # (B, K+1)

    loss_ref[...] = _fused_loss(scores, B=B, K=K)


# --------------------------------------------------------------------------
# Path 2: large vocab -- tables stay in HBM, manual row-DMA gather.
# --------------------------------------------------------------------------
def _skipgram_gather_kernel(tgt_ref, sel_ref, word_hbm, ctx_hbm, loss_ref,
                            emb_buf, sem, *, B, K):
    n_rows = B * (K + 2)

    # Issue every row-gather DMA up front.  Destinations are distinct rows of
    # the slot-major scratch (rows [0,B) = word rows, rows [(1+j)B,(2+j)B) =
    # j-th context/negative rows) and every transfer is one (1, D) row, so a
    # single shared DMA semaphore suffices and all copies overlap.
    @pl.loop(0, B)
    def _issue(b):
        pltpu.make_async_copy(
            word_hbm.at[pl.ds(tgt_ref[b], 1), :],
            emb_buf.at[pl.ds(b, 1), :],
            sem.at[0]).start()
        for j in range(K + 1):                       # static, small unroll
            idx = sel_ref[b * (K + 1) + j]
            pltpu.make_async_copy(
                ctx_hbm.at[pl.ds(idx, 1), :],
                emb_buf.at[pl.ds((1 + j) * B + b, 1), :],
                sem.at[0]).start()

    # Drain: every transfer has identical byte size, so wait n_rows times on
    # the shared semaphore (descriptor row r keeps the dependency on that row).
    @pl.loop(0, n_rows)
    def _drain(r):
        pltpu.make_async_copy(
            word_hbm.at[pl.ds(0, 1), :],
            emb_buf.at[pl.ds(r, 1), :],
            sem.at[0]).wait()

    # Compute scores in f32 (v5e has no bf16 VALU); one reduction per slot.
    word = emb_buf[pl.ds(0, B), :].astype(jnp.float32)                 # (B, D)
    cols = []
    for j in range(K + 1):
        rows = emb_buf[pl.ds((1 + j) * B, B), :].astype(jnp.float32)   # (B, D)
        cols.append(jnp.sum(rows * word, axis=-1, keepdims=True))      # (B, 1)
    scores = jnp.concatenate(cols, axis=-1)                            # (B, K+1)

    loss_ref[...] = _fused_loss(scores, B=B, K=K)


# --------------------------------------------------------------------------
# Wrapper
# --------------------------------------------------------------------------
def skipgram_neg_sampling_loss(word_embeddings, context_embeddings,
                               target_word, context_word, negative_samples,
                               *, vmem_table_budget_bytes=16 * 1024 * 1024,
                               force_gather=False):
    """Forward pass of SkipGramNegativeSampling. Returns scalar f32 loss."""
    V, D = word_embeddings.shape
    assert context_embeddings.shape == (V, D)
    assert word_embeddings.dtype == context_embeddings.dtype
    B = target_word.shape[0]
    K = negative_samples.shape[1]

    def _i32(x):
        return x if x.dtype == jnp.int32 else x.astype(jnp.int32)

    tgt = _i32(target_word).reshape(B)
    ctx = _i32(context_word).reshape(B, 1)
    neg = _i32(negative_samples).reshape(B, K)
    # slot 0 = positive context, slots 1..K = negatives
    sel = jnp.concatenate([ctx, neg], axis=1)                          # (B, K+1)

    tables_bytes = 2 * V * D * word_embeddings.dtype.itemsize
    use_mxu = (not force_gather) and tables_bytes <= vmem_table_budget_bytes

    if use_mxu:
        kernel = functools.partial(_skipgram_mxu_kernel, B=B, K=K, V=V)
        loss = pl.pallas_call(
            kernel,
            out_shape=jax.ShapeDtypeStruct((1, 1), jnp.float32),
            in_specs=[
                pl.BlockSpec(memory_space=pltpu.MemorySpace.VMEM),  # tgt (B,1)
                pl.BlockSpec(memory_space=pltpu.MemorySpace.VMEM),  # sel (B,K+1)
                pl.BlockSpec(memory_space=pltpu.MemorySpace.VMEM),  # word table
                pl.BlockSpec(memory_space=pltpu.MemorySpace.VMEM),  # ctx table
            ],
            out_specs=pl.BlockSpec(memory_space=pltpu.MemorySpace.VMEM),
        )(tgt.reshape(B, 1), sel, word_embeddings, context_embeddings)
    else:
        kernel = functools.partial(_skipgram_gather_kernel, B=B, K=K)
        loss = pl.pallas_call(
            kernel,
            out_shape=jax.ShapeDtypeStruct((1, 1), jnp.float32),
            in_specs=[
                pl.BlockSpec(memory_space=pltpu.MemorySpace.SMEM),  # tgt (B,)
                pl.BlockSpec(memory_space=pltpu.MemorySpace.SMEM),  # sel flat
                pl.BlockSpec(memory_space=pl.ANY),                  # word table (HBM)
                pl.BlockSpec(memory_space=pl.ANY),                  # ctx table (HBM)
            ],
            out_specs=pl.BlockSpec(memory_space=pltpu.MemorySpace.VMEM),
            scratch_shapes=[
                pltpu.VMEM(((K + 2) * B, D), word_embeddings.dtype),
                pltpu.SemaphoreType.DMA((1,)),
            ],
        )(tgt, sel.reshape(B * (K + 1)), word_embeddings, context_embeddings)
    return loss[0, 0]


# --------------------------------------------------------------------------
# Reference + demo
# --------------------------------------------------------------------------
def xavier_uniform(key, shape, gain):
    # torch.nn.init.xavier_uniform_ for a 2-D (fan_out, fan_in) tensor
    fan_out, fan_in = shape
    bound = gain * math.sqrt(6.0 / (fan_in + fan_out))
    return jax.random.uniform(key, shape, dtype=jnp.float32,
                              minval=-bound, maxval=bound)


def reference_loss(word_embeddings, context_embeddings,
                   target_word, context_word, negative_samples):
    w = jnp.take(word_embeddings, target_word, axis=0).astype(jnp.float32)
    c = jnp.take(context_embeddings, context_word, axis=0).astype(jnp.float32)
    n = jnp.take(context_embeddings, negative_samples, axis=0).astype(jnp.float32)
    pos = jnp.clip(jnp.sum(w * c, axis=1), -10.0, 10.0)
    pos_loss = -jnp.mean(jax.nn.log_sigmoid(pos))
    neg = jnp.clip(jnp.einsum('bkd,bd->bk', n, w,
                              precision=jax.lax.Precision.HIGHEST),
                   -10.0, 10.0)
    neg_loss = -jnp.mean(jax.nn.log_sigmoid(-neg))
    return pos_loss + neg_loss


if __name__ == "__main__":
    vocab_size = 64
    embedding_dim = 128   # lane-aligned
    B = 8                 # one f32 sublane tile
    K = 8                 # negative samples per target

    key = jax.random.PRNGKey(0)
    k_we, k_ce, k_t, k_c, k_n = jax.random.split(key, 5)

    word_embeddings = xavier_uniform(k_we, (vocab_size, embedding_dim), gain=1.4)
    context_embeddings = xavier_uniform(k_ce, (vocab_size, embedding_dim), gain=1.4)

    target_word = jax.random.randint(k_t, (B,), 0, vocab_size, dtype=jnp.int32)
    context_word = jax.random.randint(k_c, (B,), 0, vocab_size, dtype=jnp.int32)
    negative_samples = jax.random.randint(k_n, (B, K), 0, vocab_size,
                                          dtype=jnp.int32)

    args = (word_embeddings, context_embeddings,
            target_word, context_word, negative_samples)

    # Small-vocab path: VMEM-resident tables, MXU one-hot gather + contraction.
    loss_mxu = jax.block_until_ready(skipgram_neg_sampling_loss(*args))
    # Large-vocab path (forced here at small shapes to exercise it): tables in
    # HBM, manual row-DMA gather.
    loss_gather = jax.block_until_ready(
        skipgram_neg_sampling_loss(*args, force_gather=True))

    ref = jax.block_until_ready(reference_loss(*args))

    assert jnp.allclose(loss_mxu, ref, atol=1e-4, rtol=1e-4), (loss_mxu, ref)
    assert jnp.allclose(loss_gather, ref, atol=1e-4, rtol=1e-4), (loss_gather, ref)
    print("KERNEL_OK")
</pallas_src>

<mosaic_0001>
module attributes {stable_mosaic.version = 11 : i64} {
  func.func @_skipgram_mxu_kernel(%arg0: memref<8x1xi32, #tpu.memory_space<vmem>>, %arg1: memref<8x9xi32, #tpu.memory_space<vmem>>, %arg2: memref<64x128xf32, #tpu.memory_space<vmem>>, %arg3: memref<64x128xf32, #tpu.memory_space<vmem>>, %arg4: memref<1x1xf32, #tpu.memory_space<vmem>>) attributes {dimension_semantics = [], scalar_prefetch = 0 : i64, scratch_operands = 0 : i64, tpu.core_type = #tpu.core_type<tc>} {
    %c0 = arith.constant 0 : index
    %c0_0 = arith.constant 0 : index
    %0 = vector.load %arg2[%c0, %c0_0] : memref<64x128xf32, #tpu.memory_space<vmem>>, vector<64x128xf32>
    %c0_1 = arith.constant 0 : index
    %c0_2 = arith.constant 0 : index
    %1 = vector.load %arg3[%c0_1, %c0_2] : memref<64x128xf32, #tpu.memory_space<vmem>>, vector<64x128xf32>
    %2 = tpu.iota {dimensions = array<i32: 1>} : vector<8x64xi32>
    %c0_3 = arith.constant 0 : index
    %c0_4 = arith.constant 0 : index
    %3 = vector.load %arg0[%c0_3, %c0_4] : memref<8x1xi32, #tpu.memory_space<vmem>>, vector<8x1xi32>
    %4 = vector.broadcast %3 : vector<8x1xi32> to vector<8x64xi32>
    %5 = arith.cmpi eq, %2, %4 : vector<8x64xi32>
    %6 = arith.extui %5 : vector<8x64xi1> to vector<8x64xi32>
    %7 = arith.sitofp %6 : vector<8x64xi32> to vector<8x64xf32>
    %cst = arith.constant dense<0.000000e+00> : vector<8x128xf32>
    %8 = tpu.matmul %7, %0, %cst {dimension_numbers = #tpu.dot_dimension_numbers<[1], [0], [0], [1], [0, 0, 1, 1], [], []>, precision = #tpu.contract_precision<fp32>} : vector<8x64xf32>, vector<64x128xf32>, vector<8x128xf32> -> vector<8x128xf32>
    %cst_5 = arith.constant dense<0.000000e+00> : vector<8x64xf32>
    %9 = tpu.matmul %8, %1, %cst_5 {dimension_numbers = #tpu.dot_dimension_numbers<[1], [1], [0], [0], [0, 0, 1, 0], [], []>, precision = #tpu.contract_precision<fp32>} : vector<8x128xf32>, vector<64x128xf32>, vector<8x64xf32> -> vector<8x64xf32>
    %c0_6 = arith.constant 0 : index
    %c0_7 = arith.constant 0 : index
    %10 = vector.load %arg1[%c0_6, %c0_7] : memref<8x9xi32, #tpu.memory_space<vmem>>, vector<8x9xi32>
    %11 = vector.extract_strided_slice %10 {offsets = [0, 0], sizes = [8, 1], strides = [1, 1]} : vector<8x9xi32> to vector<8x1xi32>
    %12 = vector.broadcast %11 : vector<8x1xi32> to vector<8x64xi32>
    %13 = arith.cmpi eq, %2, %12 : vector<8x64xi32>
    %14 = arith.extui %13 : vector<8x64xi1> to vector<8x64xi32>
    %15 = arith.sitofp %14 : vector<8x64xi32> to vector<8x64xf32>
    %16 = arith.mulf %9, %15 : vector<8x64xf32>
    %cst_8 = arith.constant dense<0.000000e+00> : vector<8xf32>
    %17 = vector.multi_reduction <add>, %16, %cst_8 [1] : vector<8x64xf32> to vector<8xf32>
    %18 = vector.shape_cast %17 : vector<8xf32> to vector<8x1xf32>
    %19 = vector.extract_strided_slice %10 {offsets = [0, 1], sizes = [8, 1], strides = [1, 1]} : vector<8x9xi32> to vector<8x1xi32>
    %20 = vector.broadcast %19 : vector<8x1xi32> to vector<8x64xi32>
    %21 = arith.cmpi eq, %2, %20 : vector<8x64xi32>
    %22 = arith.extui %21 : vector<8x64xi1> to vector<8x64xi32>
    %23 = arith.sitofp %22 : vector<8x64xi32> to vector<8x64xf32>
    %24 = arith.mulf %9, %23 : vector<8x64xf32>
    %cst_9 = arith.constant dense<0.000000e+00> : vector<8xf32>
    %25 = vector.multi_reduction <add>, %24, %cst_9 [1] : vector<8x64xf32> to vector<8xf32>
    %26 = vector.shape_cast %25 : vector<8xf32> to vector<8x1xf32>
    %27 = vector.extract_strided_slice %10 {offsets = [0, 2], sizes = [8, 1], strides = [1, 1]} : vector<8x9xi32> to vector<8x1xi32>
    %28 = vector.broadcast %27 : vector<8x1xi32> to vector<8x64xi32>
    %29 = arith.cmpi eq, %2, %28 : vector<8x64xi32>
    %30 = arith.extui %29 : vector<8x64xi1> to vector<8x64xi32>
    %31 = arith.sitofp %30 : vector<8x64xi32> to vector<8x64xf32>
    %32 = arith.mulf %9, %31 : vector<8x64xf32>
    %cst_10 = arith.constant dense<0.000000e+00> : vector<8xf32>
    %33 = vector.multi_reduction <add>, %32, %cst_10 [1] : vector<8x64xf32> to vector<8xf32>
    %34 = vector.shape_cast %33 : vector<8xf32> to vector<8x1xf32>
    %35 = vector.extract_strided_slice %10 {offsets = [0, 3], sizes = [8, 1], strides = [1, 1]} : vector<8x9xi32> to vector<8x1xi32>
    %36 = vector.broadcast %35 : vector<8x1xi32> to vector<8x64xi32>
    %37 = arith.cmpi eq, %2, %36 : vector<8x64xi32>
    %38 = arith.extui %37 : vector<8x64xi1> to vector<8x64xi32>
    %39 = arith.sitofp %38 : vector<8x64xi32> to vector<8x64xf32>
    %40 = arith.mulf %9, %39 : vector<8x64xf32>
    %cst_11 = arith.constant dense<0.000000e+00> : vector<8xf32>
    %41 = vector.multi_reduction <add>, %40, %cst_11 [1] : vector<8x64xf32> to vector<8xf32>
    %42 = vector.shape_cast %41 : vector<8xf32> to vector<8x1xf32>
    %43 = vector.extract_strided_slice %10 {offsets = [0, 4], sizes = [8, 1], strides = [1, 1]} : vector<8x9xi32> to vector<8x1xi32>
    %44 = vector.broadcast %43 : vector<8x1xi32> to vector<8x64xi32>
    %45 = arith.cmpi eq, %2, %44 : vector<8x64xi32>
    %46 = arith.extui %45 : vector<8x64xi1> to vector<8x64xi32>
    %47 = arith.sitofp %46 : vector<8x64xi32> to vector<8x64xf32>
    %48 = arith.mulf %9, %47 : vector<8x64xf32>
    %cst_12 = arith.constant dense<0.000000e+00> : vector<8xf32>
    %49 = vector.multi_reduction <add>, %48, %cst_12 [1] : vector<8x64xf32> to vector<8xf32>
    %50 = vector.shape_cast %49 : vector<8xf32> to vector<8x1xf32>
    %51 = vector.extract_strided_slice %10 {offsets = [0, 5], sizes = [8, 1], strides = [1, 1]} : vector<8x9xi32> to vector<8x1xi32>
    %52 = vector.broadcast %51 : vector<8x1xi32> to vector<8x64xi32>
    %53 = arith.cmpi eq, %2, %52 : vector<8x64xi32>
    %54 = arith.extui %53 : vector<8x64xi1> to vector<8x64xi32>
    %55 = arith.sitofp %54 : vector<8x64xi32> to vector<8x64xf32>
    %56 = arith.mulf %9, %55 : vector<8x64xf32>
    %cst_13 = arith.constant dense<0.000000e+00> : vector<8xf32>
    %57 = vector.multi_reduction <add>, %56, %cst_13 [1] : vector<8x64xf32> to vector<8xf32>
    %58 = vector.shape_cast %57 : vector<8xf32> to vector<8x1xf32>
    %59 = vector.extract_strided_slice %10 {offsets = [0, 6], sizes = [8, 1], strides = [1, 1]} : vector<8x9xi32> to vector<8x1xi32>
    %60 = vector.broadcast %59 : vector<8x1xi32> to vector<8x64xi32>
    %61 = arith.cmpi eq, %2, %60 : vector<8x64xi32>
    %62 = arith.extui %61 : vector<8x64xi1> to vector<8x64xi32>
    %63 = arith.sitofp %62 : vector<8x64xi32> to vector<8x64xf32>
    %64 = arith.mulf %9, %63 : vector<8x64xf32>
    %cst_14 = arith.constant dense<0.000000e+00> : vector<8xf32>
    %65 = vector.multi_reduction <add>, %64, %cst_14 [1] : vector<8x64xf32> to vector<8xf32>
    %66 = vector.shape_cast %65 : vector<8xf32> to vector<8x1xf32>
    %67 = vector.extract_strided_slice %10 {offsets = [0, 7], sizes = [8, 1], strides = [1, 1]} : vector<8x9xi32> to vector<8x1xi32>
    %68 = vector.broadcast %67 : vector<8x1xi32> to vector<8x64xi32>
    %69 = arith.cmpi eq, %2, %68 : vector<8x64xi32>
    %70 = arith.extui %69 : vector<8x64xi1> to vector<8x64xi32>
    %71 = arith.sitofp %70 : vector<8x64xi32> to vector<8x64xf32>
    %72 = arith.mulf %9, %71 : vector<8x64xf32>
    %cst_15 = arith.constant dense<0.000000e+00> : vector<8xf32>
    %73 = vector.multi_reduction <add>, %72, %cst_15 [1] : vector<8x64xf32> to vector<8xf32>
    %74 = vector.shape_cast %73 : vector<8xf32> to vector<8x1xf32>
    %75 = vector.extract_strided_slice %10 {offsets = [0, 8], sizes = [8, 1], strides = [1, 1]} : vector<8x9xi32> to vector<8x1xi32>
    %76 = vector.broadcast %75 : vector<8x1xi32> to vector<8x64xi32>
    %77 = arith.cmpi eq, %2, %76 : vector<8x64xi32>
    %78 = arith.extui %77 : vector<8x64xi1> to vector<8x64xi32>
    %79 = arith.sitofp %78 : vector<8x64xi32> to vector<8x64xf32>
    %80 = arith.mulf %9, %79 : vector<8x64xf32>
    %cst_16 = arith.constant dense<0.000000e+00> : vector<8xf32>
    %81 = vector.multi_reduction <add>, %80, %cst_16 [1] : vector<8x64xf32> to vector<8xf32>
    %82 = vector.shape_cast %81 : vector<8xf32> to vector<8x1xf32>
    %83 = tpu.concatenate %18, %26, %34, %42, %50, %58, %66, %74, %82 in 1 : vector<8x1xf32>, vector<8x1xf32>, vector<8x1xf32>, vector<8x1xf32>, vector<8x1xf32>, vector<8x1xf32>, vector<8x1xf32>, vector<8x1xf32>, vector<8x1xf32> -> vector<8x9xf32>
    %cst_17 = arith.constant -1.000000e+01 : f32
    %cst_18 = arith.constant 1.000000e+01 : f32
    %84 = vector.broadcast %cst_17 : f32 to vector<8x9xf32>
    %85 = arith.maximumf %84, %83 : vector<8x9xf32>
    %86 = vector.broadcast %cst_18 : f32 to vector<8x9xf32>
    %87 = arith.minimumf %86, %85 : vector<8x9xf32>
    %88 = tpu.iota {dimensions = array<i32: 1>} : vector<8x9xi32>
    %c0_i32 = arith.constant 0 : i32
    %89 = vector.broadcast %c0_i32 : i32 to vector<8x9xi32>
    %90 = arith.cmpi eq, %88, %89 : vector<8x9xi32>
    %cst_19 = arith.constant 1.000000e+00 : f32
    %cst_20 = arith.constant -1.000000e+00 : f32
    %91 = vector.broadcast %cst_19 : f32 to vector<8x9xf32>
    %92 = vector.broadcast %cst_20 : f32 to vector<8x9xf32>
    %93 = arith.select %90, %91, %92 : vector<8x9xi1>, vector<8x9xf32>
    %c0_i32_21 = arith.constant 0 : i32
    %94 = vector.broadcast %c0_i32_21 : i32 to vector<8x9xi32>
    %95 = arith.cmpi eq, %88, %94 : vector<8x9xi32>
    %cst_22 = arith.constant 1.250000e-01 : f32
    %cst_23 = arith.constant 1.562500e-02 : f32
    %96 = vector.broadcast %cst_22 : f32 to vector<8x9xf32>
    %97 = vector.broadcast %cst_23 : f32 to vector<8x9xf32>
    %98 = arith.select %95, %96, %97 : vector<8x9xi1>, vector<8x9xf32>
    %99 = arith.mulf %93, %87 : vector<8x9xf32>
    %cst_24 = arith.constant 0.000000e+00 : f32
    %100 = vector.broadcast %cst_24 : f32 to vector<8x9xf32>
    %101 = arith.minimumf %99, %100 : vector<8x9xf32>
    %102 = math.absf %87 : vector<8x9xf32>
    %cst_25 = arith.constant 0.000000e+00 : f32
    %103 = vector.broadcast %cst_25 : f32 to vector<8x9xf32>
    %104 = arith.subf %103, %102 : vector<8x9xf32>
    %105 = math.exp %104 : vector<8x9xf32>
    %cst_26 = arith.constant 1.000000e+00 : f32
    %106 = vector.broadcast %cst_26 : f32 to vector<8x9xf32>
    %107 = arith.addf %106, %105 : vector<8x9xf32>
    %108 = math.log %107 : vector<8x9xf32>
    %109 = arith.subf %101, %108 : vector<8x9xf32>
    %110 = arith.mulf %109, %98 : vector<8x9xf32>
    %111 = vector.shape_cast %110 : vector<8x9xf32> to vector<1x8x9xf32>
    %cst_27 = arith.constant dense<0.000000e+00> : vector<1xf32>
    %112 = vector.multi_reduction <add>, %111, %cst_27 [1, 2] : vector<1x8x9xf32> to vector<1xf32>
    %113 = vector.shape_cast %112 : vector<1xf32> to vector<1x1x1xf32>
    %114 = vector.extract %113[0, 0, 0] : f32 from vector<1x1x1xf32>
    %115 = vector.broadcast %114 : f32 to vector<1x1xf32>
    %cst_28 = arith.constant 0.000000e+00 : f32
    %116 = vector.broadcast %cst_28 : f32 to vector<1x1xf32>
    %117 = arith.subf %116, %115 : vector<1x1xf32>
    %c0_29 = arith.constant 0 : index
    %c0_30 = arith.constant 0 : index
    %118 = vector.load %arg4[%c0_29, %c0_30] : memref<1x1xf32, #tpu.memory_space<vmem>>, vector<1x1xf32>
    tpu.vector_store %arg4[%c0_29, %c0_30], %117 {strides = array<i32>} : memref<1x1xf32, #tpu.memory_space<vmem>>, vector<1x1xf32>,
    return
  }
}

</mosaic_0001>

<llo_original>
// kernel: tpu_custom_call.1
$region0: #{tpu_custom_call.1}
  #allocation0 [shape = 'u32[]', space=smem, size = 0x4, offset = 0x4, fixed_abs, tag = 'smem constant byte address 0x4 - core index']
  #allocation1 [shape = 'u32[144,128]{1,0:T(1,128)}', space=vmem, size = 0x12000, scoped, tag = 'internal scratch']
  %s0 = inlined_call_operand.vmem [shape: s32[8,1], index: 0, kind: input, shape index: {}]
  %s1 = inlined_call_operand.vmem [shape: s32[8,9], index: 1, kind: input, shape index: {}]
  %s2 = inlined_call_operand.hbm [shape: f32[64,128], index: 2, kind: input, shape index: {}]
  %s3 = inlined_call_operand.hbm [shape: f32[64,128], index: 3, kind: input, shape index: {}]
  %s4 = inlined_call_operand.hbm [shape: f32[1,1], index: 4, kind: output, shape index: {}]
  %s5 = sld [smem:[#allocation0]]
  $region34: #{tpu_custom_call.1} parent=0
    _
  %s7 = ssub.s32 1, %s5
  %s8 = scalar_select 0, %s7, %s5
  $region1: #{tpu_custom_call.1} parent=0
    #allocation2 [shape = 'u8[32768]{0}', space=vmem, size = 0x8000, scoped, tag = 'input window, operand 2, single buffered']
    #allocation3 [shape = 's32[1]{0}', space=sflag, size = 0x4, scoped, tag = 'scoped memory for tpu_custom_call.1']
    #allocation4 [shape = 's32[1]{0}', space=sflag, size = 0x4, scoped, tag = 'scoped memory for tpu_custom_call.1']
    #allocation5 [shape = 'u8[32768]{0}', space=vmem, size = 0x8000, scoped, tag = 'input window, operand 3, single buffered']
    #allocation6 [shape = 's32[1]{0}', space=sflag, size = 0x4, scoped, tag = 'scoped memory for tpu_custom_call.1']
    #allocation7 [shape = 'u8[512]{0}', space=vmem, size = 0x400, scoped, tag = 'output window, operand 0, single buffered']
    %9 = vsyncpa [#allocation3], 0
    %10 = vsyncpa [#allocation6], 0
    %11 = vsyncpa [#allocation4], 0
    // Predicated region
    $region2: #{tpu_custom_call.1} parent=1 // pred_check
      _
    $region3: #{tpu_custom_call.1} parent=1 // pred_check_branch
      %13 = sbr.rel (0) target = $region5
    $region4: #{tpu_custom_call.1} parent=1 // pred_region
      _
    $region5: #{tpu_custom_call.1} parent=1 // pred_fallthru
      _
    // Predicated region
    $region6: #{tpu_custom_call.1} parent=1 // pred_check
      _
    $region7: #{tpu_custom_call.1} parent=1 // pred_check_branch
      %15 = sbr.rel (0) target = $region9
    $region8: #{tpu_custom_call.1} parent=1 // pred_region
      _
    $region9: #{tpu_custom_call.1} parent=1 // pred_fallthru
      _
    // Predicated region
    $region10: #{tpu_custom_call.1} parent=1 // pred_check
      _
    $region11: #{tpu_custom_call.1} parent=1 // pred_check_branch
      %17 = sbr.rel (0) target = $region13
    $region12: #{tpu_custom_call.1} parent=1 // pred_region
      %s19 = ssub.s32 1024, 1024
      %20 = vsyncadd [#allocation3], %s19
      %s21 = sshll.u32 [#allocation2], 4
      %s22 = int_to_ptr.vmem [resolvable:$true] %s21
      %27 = dma.hbm_to_vmem [thread:$0]  %s2, 1024, %s22, [#allocation3], 128, 128, 8
    $region13: #{tpu_custom_call.1} parent=1 // pred_fallthru
      _
    // Predicated region
    $region14: #{tpu_custom_call.1} parent=1 // pred_check
      _
    $region15: #{tpu_custom_call.1} parent=1 // pred_check_branch
      %29 = sbr.rel (0) target = $region17
    $region16: #{tpu_custom_call.1} parent=1 // pred_region
      %s31 = ssub.s32 1024, 1024
      %32 = vsyncadd [#allocation6], %s31
      %s33 = sshll.u32 [#allocation5], 4
      %s34 = int_to_ptr.vmem [resolvable:$true] %s33
      %39 = dma.hbm_to_vmem [thread:$0]  %s3, 1024, %s34, [#allocation6], 128, 128, 8
    $region17: #{tpu_custom_call.1} parent=1 // pred_fallthru
      _
    // Predicated region
    $region18: #{tpu_custom_call.1} parent=1 // pred_check
      _
    $region19: #{tpu_custom_call.1} parent=1 // pred_check_branch
      %41 = sbr.rel (0) target = $region21
    $region20: #{tpu_custom_call.1} parent=1 // pred_region
      %42 = dma.done [#allocation3], 1024
    $region21: #{tpu_custom_call.1} parent=1 // pred_fallthru
      _
    // Predicated region
    $region22: #{tpu_custom_call.1} parent=1 // pred_check
      _
    $region23: #{tpu_custom_call.1} parent=1 // pred_check_branch
      %44 = sbr.rel (0) target = $region25
    $region24: #{tpu_custom_call.1} parent=1 // pred_region
      %45 = dma.done [#allocation6], 1024
    $region25: #{tpu_custom_call.1} parent=1 // pred_fallthru
      _
    %v46 = vld [vmem:[#allocation2] sm:$0xff]
    %v47 = vld [vmem:[#allocation2 + $0x8] sm:$0xff]
    %v48 = vld [vmem:[#allocation2 + $0x10] sm:$0xff]
    %v49 = vld [vmem:[#allocation2 + $0x18] sm:$0xff]
    %v50 = vld [vmem:[#allocation2 + $0x20] sm:$0xff]
    %v51 = vld [vmem:[#allocation2 + $0x28] sm:$0xff]
    %v52 = vld [vmem:[#allocation2 + $0x30] sm:$0xff]
    %v53 = vld [vmem:[#allocation2 + $0x38] sm:$0xff]
    %v54 = vld [vmem:[#allocation5] sm:$0xff]
    %v55 = vld [vmem:[#allocation5 + $0x8] sm:$0xff]
    %v56 = vld [vmem:[#allocation5 + $0x10] sm:$0xff]
    %v57 = vld [vmem:[#allocation5 + $0x18] sm:$0xff]
    %v58 = vld [vmem:[#allocation5 + $0x20] sm:$0xff]
    %v59 = vld [vmem:[#allocation5 + $0x28] sm:$0xff]
    %v60 = vld [vmem:[#allocation5 + $0x30] sm:$0xff]
    %v61 = vld [vmem:[#allocation5 + $0x38] sm:$0xff]
    %v62 = vlaneseq
    %v63 = vand.u32 %v62, 127
    %v64 = vld [vmem:[%s0] sm:$0xff]
    %65 = vset.pattern.permute.xlu0 0
    %66 = vperm.xlu0 %65, %v64
    %v67 = vpop.permute.xlu0 %66
    %vm68 = vcmp.eq.s32.totalorder %v63, %v67
    %v69 = vsel %vm68, 1, 0
    %v70 = vcvt.s32.f32 %v69
    %vm71 = vcmask 523264
    %v73 = vsel %vm71, %v70, 0
    %75 = vmatprep.subr.mxu0 0.0
    %76 = vmatpush1.msra.mxu0 0.0
    %77 = vmatprep.subr.mxu0 0.0
    %78 = vmatpush1.msra.mxu0 0.0
    %79 = vmatprep.subr.mxu0 0.0
    %80 = vmatpush1.msra.mxu0 0.0
    %81 = vmatprep.subr.mxu0 0.0
    %82 = vmatpush1.msra.mxu0 0.0
    %83 = vmatprep.subr.mxu0 0.0
    %84 = vmatpush1.msra.mxu0 0.0
    %85 = vmatprep.subr.mxu0 0.0
    %86 = vmatpush1.msra.mxu0 0.0
    %87 = vmatprep.subr.mxu0 0.0
    %88 = vmatpush1.msra.mxu0 0.0
    %89 = vmatprep.subr.mxu0 0.0
    %90 = vmatpush1.msra.mxu0 0.0
    %91 = vmatprep.subr.mxu0 0.0
    %v92 = vand.u32 %v53, 4294901760
    %93 = vmatpush1.msra.mxu0 %v92
    %94 = vmatprep.subr.mxu0 0.0
    %v95 = vand.u32 %v52, 4294901760
    %96 = vmatpush1.msra.mxu0 %v95
    %97 = vmatprep.subr.mxu0 0.0
    %v98 = vand.u32 %v51, 4294901760
    %99 = vmatpush1.msra.mxu0 %v98
    %100 = vmatprep.subr.mxu0 0.0
    %v101 = vand.u32 %v50, 4294901760
    %102 = vmatpush1.msra.mxu0 %v101
    %103 = vmatprep.subr.mxu0 0.0
    %v104 = vand.u32 %v49, 4294901760
    %105 = vmatpush1.msra.mxu0 %v104
    %106 = vmatprep.subr.mxu0 0.0
    %v107 = vand.u32 %v48, 4294901760
    %108 = vmatpush1.msra.mxu0 %v107
    %109 = vmatprep.subr.mxu0 0.0
    %v110 = vand.u32 %v47, 4294901760
    %111 = vmatpush1.msra.mxu0 %v110
    %112 = vmatprep.subr.mxu0 0.0
    %v113 = vand.u32 %v46, 4294901760
    %114 = vmatpush1.msra.mxu0 %v113
    %115 = vmatprep.subr.mxu0 0.0
    %116 = vmatpush2.msra.mxu0 0.0
    %117 = vmatprep.subr.mxu0 0.0
    %118 = vmatpush2.msra.mxu0 0.0
    %119 = vmatprep.subr.mxu0 0.0
    %120 = vmatpush2.msra.mxu0 0.0
    %121 = vmatprep.subr.mxu0 0.0
    %122 = vmatpush2.msra.mxu0 0.0
    %123 = vmatprep.subr.mxu0 0.0
    %124 = vmatpush2.msra.mxu0 0.0
    %125 = vmatprep.subr.mxu0 0.0
    %126 = vmatpush2.msra.mxu0 0.0
    %127 = vmatprep.subr.mxu0 0.0
    %128 = vmatpush2.msra.mxu0 0.0
    %129 = vmatprep.subr.mxu0 0.0
    %130 = vmatpush2.msra.mxu0 0.0
    %131 = vmatprep.subr.mxu0 0.0
    %132 = vmatpush2.msra.mxu0 0.0
    %133 = vmatprep.subr.mxu0 0.0
    %134 = vmatpush2.msra.mxu0 0.0
    %135 = vmatprep.subr.mxu0 0.0
    %136 = vmatpush2.msra.mxu0 0.0
    %137 = vmatprep.subr.mxu0 0.0
    %138 = vmatpush2.msra.mxu0 0.0
    %139 = vmatprep.subr.mxu0 0.0
    %140 = vmatpush2.msra.mxu0 0.0
    %141 = vmatprep.subr.mxu0 0.0
    %142 = vmatpush2.msra.mxu0 0.0
    %143 = vmatprep.subr.mxu0 0.0
    %144 = vmatpush2.msra.mxu0 0.0
    %145 = vmatprep.subr.mxu0 0.0
    %146 = vmatpush2.msra.mxu0 0.0
    %147 = vmatprep.mubr.f32.mxu0 0.0
    %v148 = vand.u32 %v73, 4294901760
    %v149 = vsub.f32 %v73, %v148
    %v150 = vand.u32 %v149, 4294901760
    %v151 = vsub.f32 %v149, %v150
    %v152 = vand.u32 %v151, 4294901760
    %153 = vmatmul.mubr.f32.gmra.mxu0 %v152
    %v154 = vpop.f32.mrf.mxu0
    %v155 = vadd.f32 0.0, %v154
    %v156 = vpop.f32.mrf.mxu0
    %157 = vdwg.mxu0
    %158 = vmatprep.subr.mxu0 0.0
    %159 = vmatpush1.msra.mxu0 0.0
    %160 = vmatprep.subr.mxu0 0.0
    %161 = vmatpush1.msra.mxu0 0.0
    %162 = vmatprep.subr.mxu0 0.0
    %163 = vmatpush1.msra.mxu0 0.0
    %164 = vmatprep.subr.mxu0 0.0
    %165 = vmatpush1.msra.mxu0 0.0
    %166 = vmatprep.subr.mxu0 0.0
    %167 = vmatpush1.msra.mxu0 0.0
    %168 = vmatprep.subr.mxu0 0.0
    %169 = vmatpush1.msra.mxu0 0.0
    %170 = vmatprep.subr.mxu0 0.0
    %171 = vmatpush1.msra.mxu0 0.0
    %172 = vmatprep.subr.mxu0 0.0
    %173 = vmatpush1.msra.mxu0 0.0
    %174 = vmatprep.subr.mxu0 0.0
    %v175 = vand.u32 %v53, 4294901760
    %v176 = vsub.f32 %v53, %v175
    %v177 = vand.u32 %v176, 4294901760
    %v178 = vsub.f32 %v176, %v177
    %v179 = vand.u32 %v178, 4294901760
    %180 = vmatpush1.msra.mxu0 %v179
    %181 = vmatprep.subr.mxu0 0.0
    %v182 = vand.u32 %v52, 4294901760
    %v183 = vsub.f32 %v52, %v182
    %v184 = vand.u32 %v183, 4294901760
    %v185 = vsub.f32 %v183, %v184
    %v186 = vand.u32 %v185, 4294901760
    %187 = vmatpush1.msra.mxu0 %v186
    %188 = vmatprep.subr.mxu0 0.0
    %v189 = vand.u32 %v51, 4294901760
    %v190 = vsub.f32 %v51, %v189
    %v191 = vand.u32 %v190, 4294901760
    %v192 = vsub.f32 %v190, %v191
    %v193 = vand.u32 %v192, 4294901760
    %194 = vmatpush1.msra.mxu0 %v193
    %195 = vmatprep.subr.mxu0 0.0
    %v196 = vand.u32 %v50, 4294901760
    %v197 = vsub.f32 %v50, %v196
    %v198 = vand.u32 %v197, 4294901760
    %v199 = vsub.f32 %v197, %v198
    %v200 = vand.u32 %v199, 4294901760
    %201 = vmatpush1.msra.mxu0 %v200
    %202 = vmatprep.subr.mxu0 0.0
    %v203 = vand.u32 %v49, 4294901760
    %v204 = vsub.f32 %v49, %v203
    %v205 = vand.u32 %v204, 4294901760
    %v206 = vsub.f32 %v204, %v205
    %v207 = vand.u32 %v206, 4294901760
    %208 = vmatpush1.msra.mxu0 %v207
    %209 = vmatprep.subr.mxu0 0.0
    %v210 = vand.u32 %v48, 4294901760
    %v211 = vsub.f32 %v48, %v210
    %v212 = vand.u32 %v211, 4294901760
    %v213 = vsub.f32 %v211, %v212
    %v214 = vand.u32 %v213, 4294901760
    %215 = vmatpush1.msra.mxu0 %v214
    %216 = vmatprep.subr.mxu0 0.0
    %v217 = vand.u32 %v47, 4294901760
    %v218 = vsub.f32 %v47, %v217
    %v219 = vand.u32 %v218, 4294901760
    %v220 = vsub.f32 %v218, %v219
    %v221 = vand.u32 %v220, 4294901760
    %222 = vmatpush1.msra.mxu0 %v221
    %223 = vmatprep.subr.mxu0 0.0
    %v224 = vand.u32 %v46, 4294901760
    %v225 = vsub.f32 %v46, %v224
    %v226 = vand.u32 %v225, 4294901760
    %v227 = vsub.f32 %v225, %v226
    %v228 = vand.u32 %v227, 4294901760
    %229 = vmatpush1.msra.mxu0 %v228
    %230 = vmatprep.subr.mxu0 0.0
    %231 = vmatpush2.msra.mxu0 0.0
    %232 = vmatprep.subr.mxu0 0.0
    %233 = vmatpush2.msra.mxu0 0.0
    %234 = vmatprep.subr.mxu0 0.0
    %235 = vmatpush2.msra.mxu0 0.0
    %236 = vmatprep.subr.mxu0 0.0
    %237 = vmatpush2.msra.mxu0 0.0
    %238 = vmatprep.subr.mxu0 0.0
    %239 = vmatpush2.msra.mxu0 0.0
    %240 = vmatprep.subr.mxu0 0.0
    %241 = vmatpush2.msra.mxu0 0.0
    %242 = vmatprep.subr.mxu0 0.0
    %243 = vmatpush2.msra.mxu0 0.0
    %244 = vmatprep.subr.mxu0 0.0
    %245 = vmatpush2.msra.mxu0 0.0
    %246 = vmatprep.subr.mxu0 0.0
    %247 = vmatpush2.msra.mxu0 0.0
    %248 = vmatprep.subr.mxu0 0.0
    %249 = vmatpush2.msra.mxu0 0.0
    %250 = vmatprep.subr.mxu0 0.0
    %251 = vmatpush2.msra.mxu0 0.0
    %252 = vmatprep.subr.mxu0 0.0
    %253 = vmatpush2.msra.mxu0 0.0
    %254 = vmatprep.subr.mxu0 0.0
    %255 = vmatpush2.msra.mxu0 0.0
    %256 = vmatprep.subr.mxu0 0.0
    %257 = vmatpush2.msra.mxu0 0.0
    %258 = vmatprep.subr.mxu0 0.0
    %259 = vmatpush2.msra.mxu0 0.0
    %260 = vmatprep.subr.mxu0 0.0
    %261 = vmatpush2.msra.mxu0 0.0
    %262 = vmatprep.mubr.f32.mxu0 0.0
    %v263 = vand.u32 %v73, 4294901760
    %264 = vmatmul.mubr.f32.gmra.mxu0 %v263
    %v265 = vpop.f32.mrf.mxu0
    %v266 = vadd.f32 %v155, %v265
    %v267 = vpop.f32.mrf.mxu0
    %268 = vdwg.mxu0
    %269 = vmatprep.subr.mxu0 0.0
    %270 = vmatpush1.msra.mxu0 0.0
    %271 = vmatprep.subr.mxu0 0.0
    %272 = vmatpush1.msra.mxu0 0.0
    %273 = vmatprep.subr.mxu0 0.0
    %274 = vmatpush1.msra.mxu0 0.0
    %275 = vmatprep.subr.mxu0 0.0
    %276 = vmatpush1.msra.mxu0 0.0
    %277 = vmatprep.subr.mxu0 0.0
    %278 = vmatpush1.msra.mxu0 0.0
    %279 = vmatprep.subr.mxu0 0.0
    %280 = vmatpush1.msra.mxu0 0.0
    %281 = vmatprep.subr.mxu0 0.0
    %282 = vmatpush1.msra.mxu0 0.0
    %283 = vmatprep.subr.mxu0 0.0
    %284 = vmatpush1.msra.mxu0 0.0
    %285 = vmatprep.subr.mxu0 0.0
    %v286 = vand.u32 %v53, 4294901760
    %v287 = vsub.f32 %v53, %v286
    %288 = vmatpush1.msra.mxu0 %v287
    %289 = vmatprep.subr.mxu0 0.0
    %v290 = vand.u32 %v52, 4294901760
    %v291 = vsub.f32 %v52, %v290
    %292 = vmatpush1.msra.mxu0 %v291
    %293 = vmatprep.subr.mxu0 0.0
    %v294 = vand.u32 %v51, 4294901760
    %v295 = vsub.f32 %v51, %v294
    %296 = vmatpush1.msra.mxu0 %v295
    %297 = vmatprep.subr.mxu0 0.0
    %v298 = vand.u32 %v50, 4294901760
    %v299 = vsub.f32 %v50, %v298
    %300 = vmatpush1.msra.mxu0 %v299
    %301 = vmatprep.subr.mxu0 0.0
    %v302 = vand.u32 %v49, 4294901760
    %v303 = vsub.f32 %v49, %v302
    %304 = vmatpush1.msra.mxu0 %v303
    %305 = vmatprep.subr.mxu0 0.0
    %v306 = vand.u32 %v48, 4294901760
    %v307 = vsub.f32 %v48, %v306
    %308 = vmatpush1.msra.mxu0 %v307
    %309 = vmatprep.subr.mxu0 0.0
    %v310 = vand.u32 %v47, 4294901760
    %v311 = vsub.f32 %v47, %v310
    %312 = vmatpush1.msra.mxu0 %v311
    %313 = vmatprep.subr.mxu0 0.0
    %v314 = vand.u32 %v46, 4294901760
    %v315 = vsub.f32 %v46, %v314
    %316 = vmatpush1.msra.mxu0 %v315
    %317 = vmatprep.subr.mxu0 0.0
    %318 = vmatpush2.msra.mxu0 0.0
    %319 = vmatprep.subr.mxu0 0.0
    %320 = vmatpush2.msra.mxu0 0.0
    %321 = vmatprep.subr.mxu0 0.0
    %322 = vmatpush2.msra.mxu0 0.0
    %323 = vmatprep.subr.mxu0 0.0
    %324 = vmatpush2.msra.mxu0 0.0
    %325 = vmatprep.subr.mxu0 0.0
    %326 = vmatpush2.msra.mxu0 0.0
    %327 = vmatprep.subr.mxu0 0.0
    %328 = vmatpush2.msra.mxu0 0.0
    %329 = vmatprep.subr.mxu0 0.0
    %330 = vmatpush2.msra.mxu0 0.0
    %331 = vmatprep.subr.mxu0 0.0
    %332 = vmatpush2.msra.mxu0 0.0
    %333 = vmatprep.subr.mxu0 0.0
    %334 = vmatpush2.msra.mxu0 0.0
    %335 = vmatprep.subr.mxu0 0.0
    %336 = vmatpush2.msra.mxu0 0.0
    %337 = vmatprep.subr.mxu0 0.0
    %338 = vmatpush2.msra.mxu0 0.0
    %339 = vmatprep.subr.mxu0 0.0
    %340 = vmatpush2.msra.mxu0 0.0
    %341 = vmatprep.subr.mxu0 0.0
    %342 = vmatpush2.msra.mxu0 0.0
    %343 = vmatprep.subr.mxu0 0.0
    %344 = vmatpush2.msra.mxu0 0.0
    %345 = vmatprep.subr.mxu0 0.0
    %346 = vmatpush2.msra.mxu0 0.0
    %347 = vmatprep.subr.mxu0 0.0
    %348 = vmatpush2.msra.mxu0 0.0
    %349 = vmatprep.mubr.f32.mxu0 0.0
    %v350 = vand.u32 %v73, 4294901760
    %v351 = vsub.f32 %v73, %v350
    %352 = vmatmul.mubr.f32.gmra.mxu0 %v351
    %v353 = vpop.f32.mrf.mxu0
    %v354 = vadd.f32 %v266, %v353
    %v355 = vpop.f32.mrf.mxu0
    %356 = vdwg.mxu0
    %357 = vmatprep.subr.mxu0 0.0
    %358 = vmatpush1.msra.mxu0 0.0
    %359 = vmatprep.subr.mxu0 0.0
    %360 = vmatpush1.msra.mxu0 0.0
    %361 = vmatprep.subr.mxu0 0.0
    %362 = vmatpush1.msra.mxu0 0.0
    %363 = vmatprep.subr.mxu0 0.0
    %364 = vmatpush1.msra.mxu0 0.0
    %365 = vmatprep.subr.mxu0 0.0
    %366 = vmatpush1.msra.mxu0 0.0
    %367 = vmatprep.subr.mxu0 0.0
    %368 = vmatpush1.msra.mxu0 0.0
    %369 = vmatprep.subr.mxu0 0.0
    %370 = vmatpush1.msra.mxu0 0.0
    %371 = vmatprep.subr.mxu0 0.0
    %372 = vmatpush1.msra.mxu0 0.0
    %373 = vmatprep.subr.mxu0 0.0
    %v374 = vand.u32 %v53, 4294901760
    %375 = vmatpush1.msra.mxu0 %v374
    %376 = vmatprep.subr.mxu0 0.0
    %v377 = vand.u32 %v52, 4294901760
    %378 = vmatpush1.msra.mxu0 %v377
    %379 = vmatprep.subr.mxu0 0.0
    %v380 = vand.u32 %v51, 4294901760
    %381 = vmatpush1.msra.mxu0 %v380
    %382 = vmatprep.subr.mxu0 0.0
    %v383 = vand.u32 %v50, 4294901760
    %384 = vmatpush1.msra.mxu0 %v383
    %385 = vmatprep.subr.mxu0 0.0
    %v386 = vand.u32 %v49, 4294901760
    %387 = vmatpush1.msra.mxu0 %v386
    %388 = vmatprep.subr.mxu0 0.0
    %v389 = vand.u32 %v48, 4294901760
    %390 = vmatpush1.msra.mxu0 %v389
    %391 = vmatprep.subr.mxu0 0.0
    %v392 = vand.u32 %v47, 4294901760
    %393 = vmatpush1.msra.mxu0 %v392
    %394 = vmatprep.subr.mxu0 0.0
    %v395 = vand.u32 %v46, 4294901760
    %396 = vmatpush1.msra.mxu0 %v395
    %397 = vmatprep.subr.mxu0 0.0
    %398 = vmatpush2.msra.mxu0 0.0
    %399 = vmatprep.subr.mxu0 0.0
    %400 = vmatpush2.msra.mxu0 0.0
    %401 = vmatprep.subr.mxu0 0.0
    %402 = vmatpush2.msra.mxu0 0.0
    %403 = vmatprep.subr.mxu0 0.0
    %404 = vmatpush2.msra.mxu0 0.0
    %405 = vmatprep.subr.mxu0 0.0
    %406 = vmatpush2.msra.mxu0 0.0
    %407 = vmatprep.subr.mxu0 0.0
    %408 = vmatpush2.msra.mxu0 0.0
    %409 = vmatprep.subr.mxu0 0.0
    %410 = vmatpush2.msra.mxu0 0.0
    %411 = vmatprep.subr.mxu0 0.0
    %412 = vmatpush2.msra.mxu0 0.0
    %413 = vmatprep.subr.mxu0 0.0
    %414 = vmatpush2.msra.mxu0 0.0
    %415 = vmatprep.subr.mxu0 0.0
    %416 = vmatpush2.msra.mxu0 0.0
    %417 = vmatprep.subr.mxu0 0.0
    %418 = vmatpush2.msra.mxu0 0.0
    %419 = vmatprep.subr.mxu0 0.0
    %420 = vmatpush2.msra.mxu0 0.0
    %421 = vmatprep.subr.mxu0 0.0
    %422 = vmatpush2.msra.mxu0 0.0
    %423 = vmatprep.subr.mxu0 0.0
    %424 = vmatpush2.msra.mxu0 0.0
    %425 = vmatprep.subr.mxu0 0.0
    %426 = vmatpush2.msra.mxu0 0.0
    %427 = vmatprep.subr.mxu0 0.0
    %428 = vmatpush2.msra.mxu0 0.0
    %429 = vmatprep.mubr.f32.mxu0 0.0
    %v430 = vand.u32 %v73, 4294901760
    %v431 = vsub.f32 %v73, %v430
    %v432 = vand.u32 %v431, 4294901760
    %433 = vmatmul.mubr.f32.gmra.mxu0 %v432
    %v434 = vpop.f32.mrf.mxu0
    %v435 = vadd.f32 %v354, %v434
    %v436 = vpop.f32.mrf.mxu0
    %437 = vdwg.mxu0
    %438 = vmatprep.subr.mxu0 0.0
    %439 = vmatpush1.msra.mxu0 0.0
    %440 = vmatprep.subr.mxu0 0.0
    %441 = vmatpush1.msra.mxu0 0.0
    %442 = vmatprep.subr.mxu0 0.0
    %443 = vmatpush1.msra.mxu0 0.0
    %444 = vmatprep.subr.mxu0 0.0
    %445 = vmatpush1.msra.mxu0 0.0
    %446 = vmatprep.subr.mxu0 0.0
    %447 = vmatpush1.msra.mxu0 0.0
    %448 = vmatprep.subr.mxu0 0.0
    %449 = vmatpush1.msra.mxu0 0.0
    %450 = vmatprep.subr.mxu0 0.0
    %451 = vmatpush1.msra.mxu0 0.0
    %452 = vmatprep.subr.mxu0 0.0
    %453 = vmatpush1.msra.mxu0 0.0
    %454 = vmatprep.subr.mxu0 0.0
    %v455 = vand.u32 %v53, 4294901760
    %v456 = vsub.f32 %v53, %v455
    %v457 = vand.u32 %v456, 4294901760
    %458 = vmatpush1.msra.mxu0 %v457
    %459 = vmatprep.subr.mxu0 0.0
    %v460 = vand.u32 %v52, 4294901760
    %v461 = vsub.f32 %v52, %v460
    %v462 = vand.u32 %v461, 4294901760
    %463 = vmatpush1.msra.mxu0 %v462
    %464 = vmatprep.subr.mxu0 0.0
    %v465 = vand.u32 %v51, 4294901760
    %v466 = vsub.f32 %v51, %v465
    %v467 = vand.u32 %v466, 4294901760
    %468 = vmatpush1.msra.mxu0 %v467
    %469 = vmatprep.subr.mxu0 0.0
    %v470 = vand.u32 %v50, 4294901760
    %v471 = vsub.f32 %v50, %v470
    %v472 = vand.u32 %v471, 4294901760
    %473 = vmatpush1.msra.mxu0 %v472
    %474 = vmatprep.subr.mxu0 0.0
    %v475 = vand.u32 %v49, 4294901760
    %v476 = vsub.f32 %v49, %v475
    %v477 = vand.u32 %v476, 4294901760
    %478 = vmatpush1.msra.mxu0 %v477
    %479 = vmatprep.subr.mxu0 0.0
    %v480 = vand.u32 %v48, 4294901760
    %v481 = vsub.f32 %v48, %v480
    %v482 = vand.u32 %v481, 4294901760
    %483 = vmatpush1.msra.mxu0 %v482
    %484 = vmatprep.subr.mxu0 0.0
    %v485 = vand.u32 %v47, 4294901760
    %v486 = vsub.f32 %v47, %v485
    %v487 = vand.u32 %v486, 4294901760
    %488 = vmatpush1.msra.mxu0 %v487
    %489 = vmatprep.subr.mxu0 0.0
    %v490 = vand.u32 %v46, 4294901760
    %v491 = vsub.f32 %v46, %v490
    %v492 = vand.u32 %v491, 4294901760
    %493 = vmatpush1.msra.mxu0 %v492
    %494 = vmatprep.subr.mxu0 0.0
    %495 = vmatpush2.msra.mxu0 0.0
    %496 = vmatprep.subr.mxu0 0.0
    %497 = vmatpush2.msra.mxu0 0.0
    %498 = vmatprep.subr.mxu0 0.0
    %499 = vmatpush2.msra.mxu0 0.0
    %500 = vmatprep.subr.mxu0 0.0
    %501 = vmatpush2.msra.mxu0 0.0
    %502 = vmatprep.subr.mxu0 0.0
    %503 = vmatpush2.msra.mxu0 0.0
    %504 = vmatprep.subr.mxu0 0.0
    %505 = vmatpush2.msra.mxu0 0.0
    %506 = vmatprep.subr.mxu0 0.0
    %507 = vmatpush2.msra.mxu0 0.0
    %508 = vmatprep.subr.mxu0 0.0
    %509 = vmatpush2.msra.mxu0 0.0
    %510 = vmatprep.subr.mxu0 0.0
    %511 = vmatpush2.msra.mxu0 0.0
    %512 = vmatprep.subr.mxu0 0.0
    %513 = vmatpush2.msra.mxu0 0.0
    %514 = vmatprep.subr.mxu0 0.0
    %515 = vmatpush2.msra.mxu0 0.0
    %516 = vmatprep.subr.mxu0 0.0
    %517 = vmatpush2.msra.mxu0 0.0
    %518 = vmatprep.subr.mxu0 0.0
    %519 = vmatpush2.msra.mxu0 0.0
    %520 = vmatprep.subr.mxu0 0.0
    %521 = vmatpush2.msra.mxu0 0.0
    %522 = vmatprep.subr.mxu0 0.0
    %523 = vmatpush2.msra.mxu0 0.0
    %524 = vmatprep.subr.mxu0 0.0
    %525 = vmatpush2.msra.mxu0 0.0
    %526 = vmatprep.mubr.f32.mxu0 0.0
    %v527 = vand.u32 %v73, 4294901760
    %528 = vmatmul.mubr.f32.gmra.mxu0 %v527
    %v529 = vpop.f32.mrf.mxu0
    %v530 = vadd.f32 %v435, %v529
    %v531 = vpop.f32.mrf.mxu0
    %532 = vdwg.mxu0
    %533 = vmatprep.subr.mxu0 0.0
    %534 = vmatpush1.msra.mxu0 0.0
    %535 = vmatprep.subr.mxu0 0.0
    %536 = vmatpush1.msra.mxu0 0.0
    %537 = vmatprep.subr.mxu0 0.0
    %538 = vmatpush1.msra.mxu0 0.0
    %539 = vmatprep.subr.mxu0 0.0
    %540 = vmatpush1.msra.mxu0 0.0
    %541 = vmatprep.subr.mxu0 0.0
    %542 = vmatpush1.msra.mxu0 0.0
    %543 = vmatprep.subr.mxu0 0.0
    %544 = vmatpush1.msra.mxu0 0.0
    %545 = vmatprep.subr.mxu0 0.0
    %546 = vmatpush1.msra.mxu0 0.0
    %547 = vmatprep.subr.mxu0 0.0
    %548 = vmatpush1.msra.mxu0 0.0
    %549 = vmatprep.subr.mxu0 0.0
    %v550 = vand.u32 %v53, 4294901760
    %551 = vmatpush1.msra.mxu0 %v550
    %552 = vmatprep.subr.mxu0 0.0
    %v553 = vand.u32 %v52, 4294901760
    %554 = vmatpush1.msra.mxu0 %v553
    %555 = vmatprep.subr.mxu0 0.0
    %v556 = vand.u32 %v51, 4294901760
    %557 = vmatpush1.msra.mxu0 %v556
    %558 = vmatprep.subr.mxu0 0.0
    %v559 = vand.u32 %v50, 4294901760
    %560 = vmatpush1.msra.mxu0 %v559
    %561 = vmatprep.subr.mxu0 0.0
    %v562 = vand.u32 %v49, 4294901760
    %563 = vmatpush1.msra.mxu0 %v562
    %564 = vmatprep.subr.mxu0 0.0
    %v565 = vand.u32 %v48, 4294901760
    %566 = vmatpush1.msra.mxu0 %v565
    %567 = vmatprep.subr.mxu0 0.0
    %v568 = vand.u32 %v47, 4294901760
    %569 = vmatpush1.msra.mxu0 %v568
    %570 = vmatprep.subr.mxu0 0.0
    %v571 = vand.u32 %v46, 4294901760
    %572 = vmatpush1.msra.mxu0 %v571
    %573 = vmatprep.subr.mxu0 0.0
    %574 = vmatpush2.msra.mxu0 0.0
    %575 = vmatprep.subr.mxu0 0.0
    %576 = vmatpush2.msra.mxu0 0.0
    %577 = vmatprep.subr.mxu0 0.0
    %578 = vmatpush2.msra.mxu0 0.0
    %579 = vmatprep.subr.mxu0 0.0
    %580 = vmatpush2.msra.mxu0 0.0
    %581 = vmatprep.subr.mxu0 0.0
    %582 = vmatpush2.msra.mxu0 0.0
    %583 = vmatprep.subr.mxu0 0.0
    %584 = vmatpush2.msra.mxu0 0.0
    %585 = vmatprep.subr.mxu0 0.0
    %586 = vmatpush2.msra.mxu0 0.0
    %587 = vmatprep.subr.mxu0 0.0
    %588 = vmatpush2.msra.mxu0 0.0
    %589 = vmatprep.subr.mxu0 0.0
    %590 = vmatpush2.msra.mxu0 0.0
    %591 = vmatprep.subr.mxu0 0.0
    %592 = vmatpush2.msra.mxu0 0.0
    %593 = vmatprep.subr.mxu0 0.0
    %594 = vmatpush2.msra.mxu0 0.0
    %595 = vmatprep.subr.mxu0 0.0
    %596 = vmatpush2.msra.mxu0 0.0
    %597 = vmatprep.subr.mxu0 0.0
    %598 = vmatpush2.msra.mxu0 0.0
    %599 = vmatprep.subr.mxu0 0.0
    %600 = vmatpush2.msra.mxu0 0.0
    %601 = vmatprep.subr.mxu0 0.0
    %602 = vmatpush2.msra.mxu0 0.0
    %603 = vmatprep.subr.mxu0 0.0
    %604 = vmatpush2.msra.mxu0 0.0
    %605 = vmatprep.mubr.f32.mxu0 0.0
    %v606 = vand.u32 %v73, 4294901760
    %607 = vmatmul.mubr.f32.gmra.mxu0 %v606
    %v608 = vpop.f32.mrf.mxu0
    %v609 = vadd.f32 %v530, %v608
    %v610 = vpop.f32.mrf.mxu0
    %611 = vdwg.mxu0
    %612 = vmatprep.subr.mxu0 0.0
    %613 = vmatpush1.xpose.msra.mxu0 0.0
    %614 = vmatprep.subr.mxu0 0.0
    %615 = vmatpush1.xpose.msra.mxu0 0.0
    %616 = vmatprep.subr.mxu0 0.0
    %617 = vmatpush1.xpose.msra.mxu0 0.0
    %618 = vmatprep.subr.mxu0 0.0
    %619 = vmatpush1.xpose.msra.mxu0 0.0
    %620 = vmatprep.subr.mxu0 0.0
    %621 = vmatpush1.xpose.msra.mxu0 0.0
    %622 = vmatprep.subr.mxu0 0.0
    %623 = vmatpush1.xpose.msra.mxu0 0.0
    %624 = vmatprep.subr.mxu0 0.0
    %625 = vmatpush1.xpose.msra.mxu0 0.0
    %626 = vmatprep.subr.mxu0 0.0
    %627 = vmatpush1.xpose.msra.mxu0 0.0
    %628 = vmatprep.subr.mxu0 0.0
    %v629 = vand.u32 %v61, 4294901760
    %630 = vmatpush1.xpose.msra.mxu0 %v629
    %631 = vmatprep.subr.mxu0 0.0
    %v632 = vand.u32 %v60, 4294901760
    %633 = vmatpush1.xpose.msra.mxu0 %v632
    %634 = vmatprep.subr.mxu0 0.0
    %v635 = vand.u32 %v59, 4294901760
    %636 = vmatpush1.xpose.msra.mxu0 %v635
    %637 = vmatprep.subr.mxu0 0.0
    %v638 = vand.u32 %v58, 4294901760
    %639 = vmatpush1.xpose.msra.mxu0 %v638
    %640 = vmatprep.subr.mxu0 0.0
    %v641 = vand.u32 %v57, 4294901760
    %642 = vmatpush1.xpose.msra.mxu0 %v641
    %643 = vmatprep.subr.mxu0 0.0
    %v644 = vand.u32 %v56, 4294901760
    %645 = vmatpush1.xpose.msra.mxu0 %v644
    %646 = vmatprep.subr.mxu0 0.0
    %v647 = vand.u32 %v55, 4294901760
    %648 = vmatpush1.xpose.msra.mxu0 %v647
    %649 = vmatprep.subr.mxu0 0.0
    %v650 = vand.u32 %v54, 4294901760
    %651 = vmatpush1.xpose.msra.mxu0 %v650
    %652 = vmatprep.subr.mxu0 0.0
    %653 = vmatpush2.xpose.msra.mxu0 0.0
    %654 = vmatprep.subr.mxu0 0.0
    %655 = vmatpush2.xpose.msra.mxu0 0.0
    %656 = vmatprep.subr.mxu0 0.0
    %657 = vmatpush2.xpose.msra.mxu0 0.0
    %658 = vmatprep.subr.mxu0 0.0
    %659 = vmatpush2.xpose.msra.mxu0 0.0
    %660 = vmatprep.subr.mxu0 0.0
    %661 = vmatpush2.xpose.msra.mxu0 0.0
    %662 = vmatprep.subr.mxu0 0.0
    %663 = vmatpush2.xpose.msra.mxu0 0.0
    %664 = vmatprep.subr.mxu0 0.0
    %665 = vmatpush2.xpose.msra.mxu0 0.0
    %666 = vmatprep.subr.mxu0 0.0
    %667 = vmatpush2.xpose.msra.mxu0 0.0
    %668 = vmatprep.subr.mxu0 0.0
    %669 = vmatpush2.xpose.msra.mxu0 0.0
    %670 = vmatprep.subr.mxu0 0.0
    %671 = vmatpush2.xpose.msra.mxu0 0.0
    %672 = vmatprep.subr.mxu0 0.0
    %673 = vmatpush2.xpose.msra.mxu0 0.0
    %674 = vmatprep.subr.mxu0 0.0
    %675 = vmatpush2.xpose.msra.mxu0 0.0
    %676 = vmatprep.subr.mxu0 0.0
    %677 = vmatpush2.xpose.msra.mxu0 0.0
    %678 = vmatprep.subr.mxu0 0.0
    %679 = vmatpush2.xpose.msra.mxu0 0.0
    %680 = vmatprep.subr.mxu0 0.0
    %681 = vmatpush2.xpose.msra.mxu0 0.0
    %682 = vmatprep.subr.mxu0 0.0
    %683 = vmatpush2.xpose.msra.mxu0 0.0
    %684 = vmatprep.mubr.f32.mxu0 0.0
    %v685 = vand.u32 %v609, 4294901760
    %v686 = vsub.f32 %v609, %v685
    %v687 = vand.u32 %v686, 4294901760
    %v688 = vsub.f32 %v686, %v687
    %v689 = vand.u32 %v688, 4294901760
    %690 = vmatmul.mubr.f32.gmra.mxu0 %v689
    %v691 = vpop.f32.mrf.mxu0
    %v692 = vadd.f32 0.0, %v691
    %v693 = vpop.f32.mrf.mxu0
    %694 = vdwg.mxu0
    %695 = vmatprep.subr.mxu0 0.0
    %696 = vmatpush1.xpose.msra.mxu0 0.0
    %697 = vmatprep.subr.mxu0 0.0
    %698 = vmatpush1.xpose.msra.mxu0 0.0
    %699 = vmatprep.subr.mxu0 0.0
    %700 = vmatpush1.xpose.msra.mxu0 0.0
    %701 = vmatprep.subr.mxu0 0.0
    %702 = vmatpush1.xpose.msra.mxu0 0.0
    %703 = vmatprep.subr.mxu0 0.0
    %704 = vmatpush1.xpose.msra.mxu0 0.0
    %705 = vmatprep.subr.mxu0 0.0
    %706 = vmatpush1.xpose.msra.mxu0 0.0
    %707 = vmatprep.subr.mxu0 0.0
    %708 = vmatpush1.xpose.msra.mxu0 0.0
    %709 = vmatprep.subr.mxu0 0.0
    %710 = vmatpush1.xpose.msra.mxu0 0.0
    %711 = vmatprep.subr.mxu0 0.0
    %v712 = vand.u32 %v61, 4294901760
    %v713 = vsub.f32 %v61, %v712
    %v714 = vand.u32 %v713, 4294901760
    %v715 = vsub.f32 %v713, %v714
    %v716 = vand.u32 %v715, 4294901760
    %717 = vmatpush1.xpose.msra.mxu0 %v716
    %718 = vmatprep.subr.mxu0 0.0
    %v719 = vand.u32 %v60, 4294901760
    %v720 = vsub.f32 %v60, %v719
    %v721 = vand.u32 %v720, 4294901760
    %v722 = vsub.f32 %v720, %v721
    %v723 = vand.u32 %v722, 4294901760
    %724 = vmatpush1.xpose.msra.mxu0 %v723
    %725 = vmatprep.subr.mxu0 0.0
    %v726 = vand.u32 %v59, 4294901760
    %v727 = vsub.f32 %v59, %v726
    %v728 = vand.u32 %v727, 4294901760
    %v729 = vsub.f32 %v727, %v728
    %v730 = vand.u32 %v729, 4294901760
    %731 = vmatpush1.xpose.msra.mxu0 %v730
    %732 = vmatprep.subr.mxu0 0.0
    %v733 = vand.u32 %v58, 4294901760
    %v734 = vsub.f32 %v58, %v733
    %v735 = vand.u32 %v734, 4294901760
    %v736 = vsub.f32 %v734, %v735
    %v737 = vand.u32 %v736, 4294901760
    %738 = vmatpush1.xpose.msra.mxu0 %v737
    %739 = vmatprep.subr.mxu0 0.0
    %v740 = vand.u32 %v57, 4294901760
    %v741 = vsub.f32 %v57, %v740
    %v742 = vand.u32 %v741, 4294901760
    %v743 = vsub.f32 %v741, %v742
    %v744 = vand.u32 %v743, 4294901760
    %745 = vmatpush1.xpose.msra.mxu0 %v744
    %746 = vmatprep.subr.mxu0 0.0
    %v747 = vand.u32 %v56, 4294901760
    %v748 = vsub.f32 %v56, %v747
    %v749 = vand.u32 %v748, 4294901760
    %v750 = vsub.f32 %v748, %v749
    %v751 = vand.u32 %v750, 4294901760
    %752 = vmatpush1.xpose.msra.mxu0 %v751
    %753 = vmatprep.subr.mxu0 0.0
    %v754 = vand.u32 %v55, 4294901760
    %v755 = vsub.f32 %v55, %v754
    %v756 = vand.u32 %v755, 4294901760
    %v757 = vsub.f32 %v755, %v756
    %v758 = vand.u32 %v757, 4294901760
    %759 = vmatpush1.xpose.msra.mxu0 %v758
    %760 = vmatprep.subr.mxu0 0.0
    %v761 = vand.u32 %v54, 4294901760
    %v762 = vsub.f32 %v54, %v761
    %v763 = vand.u32 %v762, 4294901760
    %v764 = vsub.f32 %v762, %v763
    %v765 = vand.u32 %v764, 4294901760
    %766 = vmatpush1.xpose.msra.mxu0 %v765
    %767 = vmatprep.subr.mxu0 0.0
    %768 = vmatpush2.xpose.msra.mxu0 0.0
    %769 = vmatprep.subr.mxu0 0.0
    %770 = vmatpush2.xpose.msra.mxu0 0.0
    %771 = vmatprep.subr.mxu0 0.0
    %772 = vmatpush2.xpose.msra.mxu0 0.0
    %773 = vmatprep.subr.mxu0 0.0
    %774 = vmatpush2.xpose.msra.mxu0 0.0
    %775 = vmatprep.subr.mxu0 0.0
    %776 = vmatpush2.xpose.msra.mxu0 0.0
    %777 = vmatprep.subr.mxu0 0.0
    %778 = vmatpush2.xpose.msra.mxu0 0.0
    %779 = vmatprep.subr.mxu0 0.0
    %780 = vmatpush2.xpose.msra.mxu0 0.0
    %781 = vmatprep.subr.mxu0 0.0
    %782 = vmatpush2.xpose.msra.mxu0 0.0
    %783 = vmatprep.subr.mxu0 0.0
    %784 = vmatpush2.xpose.msra.mxu0 0.0
    %785 = vmatprep.subr.mxu0 0.0
    %786 = vmatpush2.xpose.msra.mxu0 0.0
    %787 = vmatprep.subr.mxu0 0.0
    %788 = vmatpush2.xpose.msra.mxu0 0.0
    %789 = vmatprep.subr.mxu0 0.0
    %790 = vmatpush2.xpose.msra.mxu0 0.0
    %791 = vmatprep.subr.mxu0 0.0
    %792 = vmatpush2.xpose.msra.mxu0 0.0
    %793 = vmatprep.subr.mxu0 0.0
    %794 = vmatpush2.xpose.msra.mxu0 0.0
    %795 = vmatprep.subr.mxu0 0.0
    %796 = vmatpush2.xpose.msra.mxu0 0.0
    %797 = vmatprep.subr.mxu0 0.0
    %798 = vmatpush2.xpose.msra.mxu0 0.0
    %799 = vmatprep.mubr.f32.mxu0 0.0
    %v800 = vand.u32 %v609, 4294901760
    %801 = vmatmul.mubr.f32.gmra.mxu0 %v800
    %v802 = vpop.f32.mrf.mxu0
    %v803 = vadd.f32 %v692, %v802
    %v804 = vpop.f32.mrf.mxu0
    %805 = vdwg.mxu0
    %806 = vmatprep.subr.mxu0 0.0
    %807 = vmatpush1.xpose.msra.mxu0 0.0
    %808 = vmatprep.subr.mxu0 0.0
    %809 = vmatpush1.xpose.msra.mxu0 0.0
    %810 = vmatprep.subr.mxu0 0.0
    %811 = vmatpush1.xpose.msra.mxu0 0.0
    %812 = vmatprep.subr.mxu0 0.0
    %813 = vmatpush1.xpose.msra.mxu0 0.0
    %814 = vmatprep.subr.mxu0 0.0
    %815 = vmatpush1.xpose.msra.mxu0 0.0
    %816 = vmatprep.subr.mxu0 0.0
    %817 = vmatpush1.xpose.msra.mxu0 0.0
    %818 = vmatprep.subr.mxu0 0.0
    %819 = vmatpush1.xpose.msra.mxu0 0.0
    %820 = vmatprep.subr.mxu0 0.0
    %821 = vmatpush1.xpose.msra.mxu0 0.0
    %822 = vmatprep.subr.mxu0 0.0
    %v823 = vand.u32 %v61, 4294901760
    %v824 = vsub.f32 %v61, %v823
    %825 = vmatpush1.xpose.msra.mxu0 %v824
    %826 = vmatprep.subr.mxu0 0.0
    %v827 = vand.u32 %v60, 4294901760
    %v828 = vsub.f32 %v60, %v827
    %829 = vmatpush1.xpose.msra.mxu0 %v828
    %830 = vmatprep.subr.mxu0 0.0
    %v831 = vand.u32 %v59, 4294901760
    %v832 = vsub.f32 %v59, %v831
    %833 = vmatpush1.xpose.msra.mxu0 %v832
    %834 = vmatprep.subr.mxu0 0.0
    %v835 = vand.u32 %v58, 4294901760
    %v836 = vsub.f32 %v58, %v835
    %837 = vmatpush1.xpose.msra.mxu0 %v836
    %838 = vmatprep.subr.mxu0 0.0
    %v839 = vand.u32 %v57, 4294901760
    %v840 = vsub.f32 %v57, %v839
    %841 = vmatpush1.xpose.msra.mxu0 %v840
    %842 = vmatprep.subr.mxu0 0.0
    %v843 = vand.u32 %v56, 4294901760
    %v844 = vsub.f32 %v56, %v843
    %845 = vmatpush1.xpose.msra.mxu0 %v844
    %846 = vmatprep.subr.mxu0 0.0
    %v847 = vand.u32 %v55, 4294901760
    %v848 = vsub.f32 %v55, %v847
    %849 = vmatpush1.xpose.msra.mxu0 %v848
    %850 = vmatprep.subr.mxu0 0.0
    %v851 = vand.u32 %v54, 4294901760
    %v852 = vsub.f32 %v54, %v851
    %853 = vmatpush1.xpose.msra.mxu0 %v852
    %854 = vmatprep.subr.mxu0 0.0
    %855 = vmatpush2.xpose.msra.mxu0 0.0
    %856 = vmatprep.subr.mxu0 0.0
    %857 = vmatpush2.xpose.msra.mxu0 0.0
    %858 = vmatprep.subr.mxu0 0.0
    %859 = vmatpush2.xpose.msra.mxu0 0.0
    %860 = vmatprep.subr.mxu0 0.0
    %861 = vmatpush2.xpose.msra.mxu0 0.0
    %862 = vmatprep.subr.mxu0 0.0
    %863 = vmatpush2.xpose.msra.mxu0 0.0
    %864 = vmatprep.subr.mxu0 0.0
    %865 = vmatpush2.xpose.msra.mxu0 0.0
    %866 = vmatprep.subr.mxu0 0.0
    %867 = vmatpush2.xpose.msra.mxu0 0.0
    %868 = vmatprep.subr.mxu0 0.0
    %869 = vmatpush2.xpose.msra.mxu0 0.0
    %870 = vmatprep.subr.mxu0 0.0
    %871 = vmatpush2.xpose.msra.mxu0 0.0
    %872 = vmatprep.subr.mxu0 0.0
    %873 = vmatpush2.xpose.msra.mxu0 0.0
    %874 = vmatprep.subr.mxu0 0.0
    %875 = vmatpush2.xpose.msra.mxu0 0.0
    %876 = vmatprep.subr.mxu0 0.0
    %877 = vmatpush2.xpose.msra.mxu0 0.0
    %878 = vmatprep.subr.mxu0 0.0
    %879 = vmatpush2.xpose.msra.mxu0 0.0
    %880 = vmatprep.subr.mxu0 0.0
    %881 = vmatpush2.xpose.msra.mxu0 0.0
    %882 = vmatprep.subr.mxu0 0.0
    %883 = vmatpush2.xpose.msra.mxu0 0.0
    %884 = vmatprep.subr.mxu0 0.0
    %885 = vmatpush2.xpose.msra.mxu0 0.0
    %886 = vmatprep.mubr.f32.mxu0 0.0
    %v887 = vand.u32 %v609, 4294901760
    %v888 = vsub.f32 %v609, %v887
    %889 = vmatmul.mubr.f32.gmra.mxu0 %v888
    %v890 = vpop.f32.mrf.mxu0
    %v891 = vadd.f32 %v803, %v890
    %v892 = vpop.f32.mrf.mxu0
    %893 = vdwg.mxu0
    %894 = vmatprep.subr.mxu0 0.0
    %895 = vmatpush1.xpose.msra.mxu0 0.0
    %896 = vmatprep.subr.mxu0 0.0
    %897 = vmatpush1.xpose.msra.mxu0 0.0
    %898 = vmatprep.subr.mxu0 0.0
    %899 = vmatpush1.xpose.msra.mxu0 0.0
    %900 = vmatprep.subr.mxu0 0.0
    %901 = vmatpush1.xpose.msra.mxu0 0.0
    %902 = vmatprep.subr.mxu0 0.0
    %903 = vmatpush1.xpose.msra.mxu0 0.0
    %904 = vmatprep.subr.mxu0 0.0
    %905 = vmatpush1.xpose.msra.mxu0 0.0
    %906 = vmatprep.subr.mxu0 0.0
    %907 = vmatpush1.xpose.msra.mxu0 0.0
    %908 = vmatprep.subr.mxu0 0.0
    %909 = vmatpush1.xpose.msra.mxu0 0.0
    %910 = vmatprep.subr.mxu0 0.0
    %v911 = vand.u32 %v61, 4294901760
    %912 = vmatpush1.xpose.msra.mxu0 %v911
    %913 = vmatprep.subr.mxu0 0.0
    %v914 = vand.u32 %v60, 4294901760
    %915 = vmatpush1.xpose.msra.mxu0 %v914
    %916 = vmatprep.subr.mxu0 0.0
    %v917 = vand.u32 %v59, 4294901760
    %918 = vmatpush1.xpose.msra.mxu0 %v917
    %919 = vmatprep.subr.mxu0 0.0
    %v920 = vand.u32 %v58, 4294901760
    %921 = vmatpush1.xpose.msra.mxu0 %v920
    %922 = vmatprep.subr.mxu0 0.0
    %v923 = vand.u32 %v57, 4294901760
    %924 = vmatpush1.xpose.msra.mxu0 %v923
    %925 = vmatprep.subr.mxu0 0.0
    %v926 = vand.u32 %v56, 4294901760
    %927 = vmatpush1.xpose.msra.mxu0 %v926
    %928 = vmatprep.subr.mxu0 0.0
    %v929 = vand.u32 %v55, 4294901760
    %930 = vmatpush1.xpose.msra.mxu0 %v929
    %931 = vmatprep.subr.mxu0 0.0
    %v932 = vand.u32 %v54, 4294901760
    %933 = vmatpush1.xpose.msra.mxu0 %v932
    %934 = vmatprep.subr.mxu0 0.0
    %935 = vmatpush2.xpose.msra.mxu0 0.0
    %936 = vmatprep.subr.mxu0 0.0
    %937 = vmatpush2.xpose.msra.mxu0 0.0
    %938 = vmatprep.subr.mxu0 0.0
    %939 = vmatpush2.xpose.msra.mxu0 0.0
    %940 = vmatprep.subr.mxu0 0.0
    %941 = vmatpush2.xpose.msra.mxu0 0.0
    %942 = vmatprep.subr.mxu0 0.0
    %943 = vmatpush2.xpose.msra.mxu0 0.0
    %944 = vmatprep.subr.mxu0 0.0
    %945 = vmatpush2.xpose.msra.mxu0 0.0
    %946 = vmatprep.subr.mxu0 0.0
    %947 = vmatpush2.xpose.msra.mxu0 0.0
    %948 = vmatprep.subr.mxu0 0.0
    %949 = vmatpush2.xpose.msra.mxu0 0.0
    %950 = vmatprep.subr.mxu0 0.0
    %951 = vmatpush2.xpose.msra.mxu0 0.0
    %952 = vmatprep.subr.mxu0 0.0
    %953 = vmatpush2.xpose.msra.mxu0 0.0
    %954 = vmatprep.subr.mxu0 0.0
    %955 = vmatpush2.xpose.msra.mxu0 0.0
    %956 = vmatprep.subr.mxu0 0.0
    %957 = vmatpush2.xpose.msra.mxu0 0.0
    %958 = vmatprep.subr.mxu0 0.0
    %959 = vmatpush2.xpose.msra.mxu0 0.0
    %960 = vmatprep.subr.mxu0 0.0
    %961 = vmatpush2.xpose.msra.mxu0 0.0
    %962 = vmatprep.subr.mxu0 0.0
    %963 = vmatpush2.xpose.msra.mxu0 0.0
    %964 = vmatprep.subr.mxu0 0.0
    %965 = vmatpush2.xpose.msra.mxu0 0.0
    %966 = vmatprep.mubr.f32.mxu0 0.0
    %v967 = vand.u32 %v609, 4294901760
    %v968 = vsub.f32 %v609, %v967
    %v969 = vand.u32 %v968, 4294901760
    %970 = vmatmul.mubr.f32.gmra.mxu0 %v969
    %v971 = vpop.f32.mrf.mxu0
    %v972 = vadd.f32 %v891, %v971
    %v973 = vpop.f32.mrf.mxu0
    %974 = vdwg.mxu0
    %975 = vmatprep.subr.mxu0 0.0
    %976 = vmatpush1.xpose.msra.mxu0 0.0
    %977 = vmatprep.subr.mxu0 0.0
    %978 = vmatpush1.xpose.msra.mxu0 0.0
    %979 = vmatprep.subr.mxu0 0.0
    %980 = vmatpush1.xpose.msra.mxu0 0.0
    %981 = vmatprep.subr.mxu0 0.0
    %982 = vmatpush1.xpose.msra.mxu0 0.0
    %983 = vmatprep.subr.mxu0 0.0
    %984 = vmatpush1.xpose.msra.mxu0 0.0
    %985 = vmatprep.subr.mxu0 0.0
    %986 = vmatpush1.xpose.msra.mxu0 0.0
    %987 = vmatprep.subr.mxu0 0.0
    %988 = vmatpush1.xpose.msra.mxu0 0.0
    %989 = vmatprep.subr.mxu0 0.0
    %990 = vmatpush1.xpose.msra.mxu0 0.0
    %991 = vmatprep.subr.mxu0 0.0
    %v992 = vand.u32 %v61, 4294901760
    %v993 = vsub.f32 %v61, %v992
    %v994 = vand.u32 %v993, 4294901760
    %995 = vmatpush1.xpose.msra.mxu0 %v994
    %996 = vmatprep.subr.mxu0 0.0
    %v997 = vand.u32 %v60, 4294901760
    %v998 = vsub.f32 %v60, %v997
    %v999 = vand.u32 %v998, 4294901760
    %1000 = vmatpush1.xpose.msra.mxu0 %v999
    %1001 = vmatprep.subr.mxu0 0.0
    %v1002 = vand.u32 %v59, 4294901760
    %v1003 = vsub.f32 %v59, %v1002
    %v1004 = vand.u32 %v1003, 4294901760
    %1005 = vmatpush1.xpose.msra.mxu0 %v1004
    %1006 = vmatprep.subr.mxu0 0.0
    %v1007 = vand.u32 %v58, 4294901760
    %v1008 = vsub.f32 %v58, %v1007
    %v1009 = vand.u32 %v1008, 4294901760
    %1010 = vmatpush1.xpose.msra.mxu0 %v1009
    %1011 = vmatprep.subr.mxu0 0.0
    %v1012 = vand.u32 %v57, 4294901760
    %v1013 = vsub.f32 %v57, %v1012
    %v1014 = vand.u32 %v1013, 4294901760
    %1015 = vmatpush1.xpose.msra.mxu0 %v1014
    %1016 = vmatprep.subr.mxu0 0.0
    %v1017 = vand.u32 %v56, 4294901760
    %v1018 = vsub.f32 %v56, %v1017
    %v1019 = vand.u32 %v1018, 4294901760
    %1020 = vmatpush1.xpose.msra.mxu0 %v1019
    %1021 = vmatprep.subr.mxu0 0.0
    %v1022 = vand.u32 %v55, 4294901760
    %v1023 = vsub.f32 %v55, %v1022
    %v1024 = vand.u32 %v1023, 4294901760
    %1025 = vmatpush1.xpose.msra.mxu0 %v1024
    %1026 = vmatprep.subr.mxu0 0.0
    %v1027 = vand.u32 %v54, 4294901760
    %v1028 = vsub.f32 %v54, %v1027
    %v1029 = vand.u32 %v1028, 4294901760
    %1030 = vmatpush1.xpose.msra.mxu0 %v1029
    %1031 = vmatprep.subr.mxu0 0.0
    %1032 = vmatpush2.xpose.msra.mxu0 0.0
    %1033 = vmatprep.subr.mxu0 0.0
    %1034 = vmatpush2.xpose.msra.mxu0 0.0
    %1035 = vmatprep.subr.mxu0 0.0
    %1036 = vmatpush2.xpose.msra.mxu0 0.0
    %1037 = vmatprep.subr.mxu0 0.0
    %1038 = vmatpush2.xpose.msra.mxu0 0.0
    %1039 = vmatprep.subr.mxu0 0.0
    %1040 = vmatpush2.xpose.msra.mxu0 0.0
    %1041 = vmatprep.subr.mxu0 0.0
    %1042 = vmatpush2.xpose.msra.mxu0 0.0
    %1043 = vmatprep.subr.mxu0 0.0
    %1044 = vmatpush2.xpose.msra.mxu0 0.0
    %1045 = vmatprep.subr.mxu0 0.0
    %1046 = vmatpush2.xpose.msra.mxu0 0.0
    %1047 = vmatprep.subr.mxu0 0.0
    %1048 = vmatpush2.xpose.msra.mxu0 0.0
    %1049 = vmatprep.subr.mxu0 0.0
    %1050 = vmatpush2.xpose.msra.mxu0 0.0
    %1051 = vmatprep.subr.mxu0 0.0
    %1052 = vmatpush2.xpose.msra.mxu0 0.0
    %1053 = vmatprep.subr.mxu0 0.0
    %1054 = vmatpush2.xpose.msra.mxu0 0.0
    %1055 = vmatprep.subr.mxu0 0.0
    %1056 = vmatpush2.xpose.msra.mxu0 0.0
    %1057 = vmatprep.subr.mxu0 0.0
    %1058 = vmatpush2.xpose.msra.mxu0 0.0
    %1059 = vmatprep.subr.mxu0 0.0
    %1060 = vmatpush2.xpose.msra.mxu0 0.0
    %1061 = vmatprep.subr.mxu0 0.0
    %1062 = vmatpush2.xpose.msra.mxu0 0.0
    %1063 = vmatprep.mubr.f32.mxu0 0.0
    %v1064 = vand.u32 %v609, 4294901760
    %1065 = vmatmul.mubr.f32.gmra.mxu0 %v1064
    %v1066 = vpop.f32.mrf.mxu0
    %v1067 = vadd.f32 %v972, %v1066
    %v1068 = vpop.f32.mrf.mxu0
    %1069 = vdwg.mxu0
    %1070 = vmatprep.subr.mxu0 0.0
    %1071 = vmatpush1.xpose.msra.mxu0 0.0
    %1072 = vmatprep.subr.mxu0 0.0
    %1073 = vmatpush1.xpose.msra.mxu0 0.0
    %1074 = vmatprep.subr.mxu0 0.0
    %1075 = vmatpush1.xpose.msra.mxu0 0.0
    %1076 = vmatprep.subr.mxu0 0.0
    %1077 = vmatpush1.xpose.msra.mxu0 0.0
    %1078 = vmatprep.subr.mxu0 0.0
    %1079 = vmatpush1.xpose.msra.mxu0 0.0
    %1080 = vmatprep.subr.mxu0 0.0
    %1081 = vmatpush1.xpose.msra.mxu0 0.0
    %1082 = vmatprep.subr.mxu0 0.0
    %1083 = vmatpush1.xpose.msra.mxu0 0.0
    %1084 = vmatprep.subr.mxu0 0.0
    %1085 = vmatpush1.xpose.msra.mxu0 0.0
    %1086 = vmatprep.subr.mxu0 0.0
    %v1087 = vand.u32 %v61, 4294901760
    %1088 = vmatpush1.xpose.msra.mxu0 %v1087
    %1089 = vmatprep.subr.mxu0 0.0
    %v1090 = vand.u32 %v60, 4294901760
    %1091 = vmatpush1.xpose.msra.mxu0 %v1090
    %1092 = vmatprep.subr.mxu0 0.0
    %v1093 = vand.u32 %v59, 4294901760
    %1094 = vmatpush1.xpose.msra.mxu0 %v1093
    %1095 = vmatprep.subr.mxu0 0.0
    %v1096 = vand.u32 %v58, 4294901760
    %1097 = vmatpush1.xpose.msra.mxu0 %v1096
    %1098 = vmatprep.subr.mxu0 0.0
    %v1099 = vand.u32 %v57, 4294901760
    %1100 = vmatpush1.xpose.msra.mxu0 %v1099
    %1101 = vmatprep.subr.mxu0 0.0
    %v1102 = vand.u32 %v56, 4294901760
    %1103 = vmatpush1.xpose.msra.mxu0 %v1102
    %1104 = vmatprep.subr.mxu0 0.0
    %v1105 = vand.u32 %v55, 4294901760
    %1106 = vmatpush1.xpose.msra.mxu0 %v1105
    %1107 = vmatprep.subr.mxu0 0.0
    %v1108 = vand.u32 %v54, 4294901760
    %1109 = vmatpush1.xpose.msra.mxu0 %v1108
    %1110 = vmatprep.subr.mxu0 0.0
    %1111 = vmatpush2.xpose.msra.mxu0 0.0
    %1112 = vmatprep.subr.mxu0 0.0
    %1113 = vmatpush2.xpose.msra.mxu0 0.0
    %1114 = vmatprep.subr.mxu0 0.0
    %1115 = vmatpush2.xpose.msra.mxu0 0.0
    %1116 = vmatprep.subr.mxu0 0.0
    %1117 = vmatpush2.xpose.msra.mxu0 0.0
    %1118 = vmatprep.subr.mxu0 0.0
    %1119 = vmatpush2.xpose.msra.mxu0 0.0
    %1120 = vmatprep.subr.mxu0 0.0
    %1121 = vmatpush2.xpose.msra.mxu0 0.0
    %1122 = vmatprep.subr.mxu0 0.0
    %1123 = vmatpush2.xpose.msra.mxu0 0.0
    %1124 = vmatprep.subr.mxu0 0.0
    %1125 = vmatpush2.xpose.msra.mxu0 0.0
    %1126 = vmatprep.subr.mxu0 0.0
    %1127 = vmatpush2.xpose.msra.mxu0 0.0
    %1128 = vmatprep.subr.mxu0 0.0
    %1129 = vmatpush2.xpose.msra.mxu0 0.0
    %1130 = vmatprep.subr.mxu0 0.0
    %1131 = vmatpush2.xpose.msra.mxu0 0.0
    %1132 = vmatprep.subr.mxu0 0.0
    %1133 = vmatpush2.xpose.msra.mxu0 0.0
    %1134 = vmatprep.subr.mxu0 0.0
    %1135 = vmatpush2.xpose.msra.mxu0 0.0
    %1136 = vmatprep.subr.mxu0 0.0
    %1137 = vmatpush2.xpose.msra.mxu0 0.0
    %1138 = vmatprep.subr.mxu0 0.0
    %1139 = vmatpush2.xpose.msra.mxu0 0.0
    %1140 = vmatprep.subr.mxu0 0.0
    %1141 = vmatpush2.xpose.msra.mxu0 0.0
    %1142 = vmatprep.mubr.f32.mxu0 0.0
    %v1143 = vand.u32 %v609, 4294901760
    %1144 = vmatmul.mubr.f32.gmra.mxu0 %v1143
    %v1145 = vpop.f32.mrf.mxu0
    %v1146 = vadd.f32 %v1067, %v1145
    %v1147 = vpop.f32.mrf.mxu0
    %1148 = vdwg.mxu0
    %v1149 = vld [vmem:[%s1] sm:$0xff]
    %1150 = vset.pattern.permute.xlu0 0
    %1151 = vperm.xlu0 %1150, %v1149
    %v1152 = vpop.permute.xlu0 %1151
    %vm1153 = vcmp.eq.s32.totalorder %v63, %v1152
    %v1154 = vsel %vm1153, 1, 0
    %v1155 = vcvt.s32.f32 %v1154
    %v1156 = vmul.f32 %v1146, %v1155
    %v1157 = vsel %vm71, %v1156, 0.0
    %1158 = vadd.xlane.f32.xlu0 %v1157
    %v1159 = vpop.xlane.xlu0 %1158
    %1160 = vset.pattern.permute.xlu0 1
    %1161 = vperm.xlu0 %1160, %v1149
    %v1162 = vpop.permute.xlu0 %1161
    %vm1163 = vcmp.eq.s32.totalorder %v63, %v1162
    %v1164 = vsel %vm1163, 1, 0
    %v1165 = vcvt.s32.f32 %v1164
    %v1166 = vmul.f32 %v1146, %v1165
    %v1167 = vsel %vm71, %v1166, 0.0
    %1168 = vadd.xlane.f32.xlu0 %v1167
    %v1169 = vpop.xlane.xlu0 %1168
    %1170 = vset.pattern.permute.xlu0 2
    %1171 = vperm.xlu0 %1170, %v1149
    %v1172 = vpop.permute.xlu0 %1171
    %vm1173 = vcmp.eq.s32.totalorder %v63, %v1172
    %v1174 = vsel %vm1173, 1, 0
    %v1175 = vcvt.s32.f32 %v1174
    %v1176 = vmul.f32 %v1146, %v1175
    %v1177 = vsel %vm71, %v1176, 0.0
    %1178 = vadd.xlane.f32.xlu0 %v1177
    %v1179 = vpop.xlane.xlu0 %1178
    %1180 = vset.pattern.permute.xlu0 3
    %1181 = vperm.xlu0 %1180, %v1149
    %v1182 = vpop.permute.xlu0 %1181
    %vm1183 = vcmp.eq.s32.totalorder %v63, %v1182
    %v1184 = vsel %vm1183, 1, 0
    %v1185 = vcvt.s32.f32 %v1184
    %v1186 = vmul.f32 %v1146, %v1185
    %v1187 = vsel %vm71, %v1186, 0.0
    %1188 = vadd.xlane.f32.xlu0 %v1187
    %v1189 = vpop.xlane.xlu0 %1188
    %1190 = vset.pattern.permute.xlu0 4
    %1191 = vperm.xlu0 %1190, %v1149
    %v1192 = vpop.permute.xlu0 %1191
    %vm1193 = vcmp.eq.s32.totalorder %v63, %v1192
    %v1194 = vsel %vm1193, 1, 0
    %v1195 = vcvt.s32.f32 %v1194
    %v1196 = vmul.f32 %v1146, %v1195
    %v1197 = vsel %vm71, %v1196, 0.0
    %1198 = vadd.xlane.f32.xlu0 %v1197
    %v1199 = vpop.xlane.xlu0 %1198
    %1200 = vset.pattern.permute.xlu0 5
    %1201 = vperm.xlu0 %1200, %v1149
    %v1202 = vpop.permute.xlu0 %1201
    %vm1203 = vcmp.eq.s32.totalorder %v63, %v1202
    %v1204 = vsel %vm1203, 1, 0
    %v1205 = vcvt.s32.f32 %v1204
    %v1206 = vmul.f32 %v1146, %v1205
    %v1207 = vsel %vm71, %v1206, 0.0
    %1208 = vadd.xlane.f32.xlu0 %v1207
    %v1209 = vpop.xlane.xlu0 %1208
    %1210 = vset.pattern.permute.xlu0 6
    %1211 = vperm.xlu0 %1210, %v1149
    %v1212 = vpop.permute.xlu0 %1211
    %vm1213 = vcmp.eq.s32.totalorder %v63, %v1212
    %v1214 = vsel %vm1213, 1, 0
    %v1215 = vcvt.s32.f32 %v1214
    %v1216 = vmul.f32 %v1146, %v1215
    %v1217 = vsel %vm71, %v1216, 0.0
    %1218 = vadd.xlane.f32.xlu0 %v1217
    %v1219 = vpop.xlane.xlu0 %1218
    %1220 = vset.pattern.permute.xlu0 7
    %1221 = vperm.xlu0 %1220, %v1149
    %v1222 = vpop.permute.xlu0 %1221
    %vm1223 = vcmp.eq.s32.totalorder %v63, %v1222
    %v1224 = vsel %vm1223, 1, 0
    %v1225 = vcvt.s32.f32 %v1224
    %v1226 = vmul.f32 %v1146, %v1225
    %v1227 = vsel %vm71, %v1226, 0.0
    %1228 = vadd.xlane.f32.xlu0 %v1227
    %v1229 = vpop.xlane.xlu0 %1228
    %1230 = vset.pattern.permute.xlu0 8
    %1231 = vperm.xlu0 %1230, %v1149
    %v1232 = vpop.permute.xlu0 %1231
    %vm1233 = vcmp.eq.s32.totalorder %v63, %v1232
    %v1234 = vsel %vm1233, 1, 0
    %v1235 = vcvt.s32.f32 %v1234
    %v1236 = vmul.f32 %v1146, %v1235
    %v1237 = vsel %vm71, %v1236, 0.0
    %1238 = vadd.xlane.f32.xlu0 %v1237
    %v1239 = vpop.xlane.xlu0 %1238
    %vm1240 = vcmask 7168
    %v1241 = vsel %vm1240, %v1159, %v1169
    %vm1242 = vcmask 15360
    %v1243 = vsel %vm1242, %v1241, %v1179
    %vm1244 = vcmask 23552
    %v1245 = vsel %vm1244, %v1243, %v1189
    %vm1246 = vcmask 31744
    %v1247 = vsel %vm1246, %v1245, %v1199
    %vm1248 = vcmask 39936
    %v1249 = vsel %vm1248, %v1247, %v1209
    %vm1250 = vcmask 48128
    %v1251 = vsel %vm1250, %v1249, %v1219
    %vm1252 = vcmask 56320
    %v1253 = vsel %vm1252, %v1251, %v1229
    %vm1254 = vcmask 64512
    %v1255 = vsel %vm1254, %v1253, %v1239
    %v1256 = vmax.f32 %v1255, -10.0
    %v1257 = vmin.f32 %v1256, 10.0
    %vm1258 = vcmp.eq.s32.totalorder %v63, 0
    %v1259 = vsel %vm1258, 1.0, -1.0
    %v1260 = vsel %vm1258, 0.125, 0.015625
    %v1261 = vmul.f32 %v1259, %v1257
    %v1262 = vmin.f32 %v1261, 0.0
    %v1263 = vand.u32 2147483647, %v1257
    %v1264 = vsub.f32 0.0, %v1263
    %v1265 = vmul.f32 %v1264, 1.442695
    %v1266 = vpow.pop %v1265
    %v1267 = vadd.f32 %v1266, 1.0
    %v1268 = vlog2.pop %v1267
    %v1269 = vmul.f32 %v1268, 0.6931472
    %v1270 = vsub.f32 %v1262, %v1269
    %v1271 = vmul.f32 %v1270, %v1260
    %vm1272 = vcmask 72704
    %v1273 = vsel %vm1272, %v1271, 0.0
    %1274 = vadd.xlane.f32.xlu0 %v1273
    %v1275 = vpop.xlane.xlu0 %1274
    %v1276 = vrot.slane %v1275, 4
    %v1277 = vadd.f32 %v1275, %v1276
    %v1278 = vrot.slane %v1277, 2
    %v1279 = vadd.f32 %v1277, %v1278
    %v1280 = vrot.slane %v1279, 1
    %v1281 = vadd.f32 %v1279, %v1280
    %s1282 = vtos %v1281
    %v1283 = vstv %s1282
    %v1284 = vsub.f32 0.0, %v1283
    %vm1285 = vcmask 0
    %1286 = vst.msk [vmem:[#allocation7] sm:$0x1] %vm1285, %v1284
    // Predicated region
    $region26: #{tpu_custom_call.1} parent=1 // pred_check
      _
    $region27: #{tpu_custom_call.1} parent=1 // pred_check_branch
      %1288 = sbr.rel (0) target = $region29
    $region28: #{tpu_custom_call.1} parent=1 // pred_region
      %s1290 = ssub.s32 16, 16
      %1291 = vsyncadd [#allocation4], %s1290
      %s1293 = sshll.u32 [#allocation7], 4
      %s1294 = int_to_ptr.vmem [resolvable:$true] %s1293
      %1296 = dma.vmem_to_hbm [thread:$0]  %s1294, 16, %s4, [#allocation4]
    $region29: #{tpu_custom_call.1} parent=1 // pred_fallthru
      _
    // Predicated region
    $region30: #{tpu_custom_call.1} parent=1 // pred_check
      _
    $region31: #{tpu_custom_call.1} parent=1 // pred_check_branch
      %1298 = sbr.rel (0) target = $region33
    $region32: #{tpu_custom_call.1} parent=1 // pred_region
      %1299 = dma.done [#allocation4], 16
    $region33: #{tpu_custom_call.1} parent=1 // pred_fallthru
      _
    %1300 = vsyncpa [#allocation3], 1
    %1301 = vsyncpa [#allocation6], 1
    %1302 = vsyncpa [#allocation4], 1

</llo_original>
